<compile_context>
chip_gen: v7x
topology: tpu7x:2x2x1
jax: 0.10.0
libtpu: 0.0.40
codegen_flags: <defaults>
</compile_context>

<pallas_src>
import jax
import jax.numpy as jnp
import numpy as np
from jax.experimental import pallas as pl
from jax.experimental.pallas import tpu as pltpu

BN_EPS = 1e-5
LANE = 128      # lane width: pad feature dims to multiples of this
TILE_M = 128    # A_hat row tile  (raise to 256-512 for large graphs)
TILE_K = 128    # A_hat reduction (source-node) tile


def _round_up(x, m):
    return (x + m - 1) // m * m


# ----------------------------------------------------------------------------
# Kernel 1: fused GCN layer 1 (+ layer-2 weight multiply)
#   acc += A1[i,k] @ X[k]                    (bf16 MXU inputs, f32 accumulate)
#   at k == last:
#     h      = acc @ W1 + b1                 -> hidden output
#     act    = relu(h * bn_scale + bn_shift) (BN folded on host; eval mode)
#     aw2    = act @ W2                      -> bf16 output fed to layer 2
# ----------------------------------------------------------------------------
def gcn_layer1_kernel(a_ref, x_ref, w1_ref, b1_ref, scale_ref, shift_ref,
                      w2_ref, hidden_ref, aw2_ref, acc_ref):
    k = pl.program_id(1)

    @pl.when(k == 0)
    def _():
        acc_ref[...] = jnp.zeros_like(acc_ref)

    acc_ref[...] += jnp.dot(a_ref[...], x_ref[...],
                            preferred_element_type=jnp.float32)

    @pl.when(k == pl.num_programs(1) - 1)
    def _():
        h = jnp.dot(acc_ref[...], w1_ref[...],
                    preferred_element_type=jnp.float32) + b1_ref[...]
        hidden_ref[...] = h.astype(hidden_ref.dtype)
        act = jnp.maximum(h * scale_ref[...] + shift_ref[...], 0.0)
        # TODO(synk): F.dropout omitted — module evaluated in eval mode (identity).
        aw2 = jnp.dot(act, w2_ref[...], preferred_element_type=jnp.float32)
        aw2_ref[...] = aw2.astype(aw2_ref.dtype)


# ----------------------------------------------------------------------------
# Kernel 2: layer-2 aggregation   out = A2 @ (act @ W2) + b2
# ----------------------------------------------------------------------------
def gcn_layer2_kernel(a_ref, xw_ref, b2_ref, out_ref, acc_ref):
    k = pl.program_id(1)

    @pl.when(k == 0)
    def _():
        acc_ref[...] = jnp.zeros_like(acc_ref)

    acc_ref[...] += jnp.dot(a_ref[...], xw_ref[...],
                            preferred_element_type=jnp.float32)

    @pl.when(k == pl.num_programs(1) - 1)
    def _():
        out_ref[...] = (acc_ref[...] + b2_ref[...]).astype(out_ref.dtype)


_COMPILER_PARAMS = pltpu.CompilerParams(
    dimension_semantics=("parallel", "arbitrary"),  # row tiles parallel, K reduce
    vmem_limit_bytes=32 * 1024 * 1024,              # safe on v5e/v6e/v7x
)


# ----------------------------------------------------------------------------
# pallas_call wrappers
# ----------------------------------------------------------------------------
def gcn_layer1(a1, x, w1, b1, scale, shift, w2):
    n_pad = a1.shape[0]
    fin = x.shape[1]
    hpad = w1.shape[1]
    cpad = w2.shape[1]
    grid = (n_pad // TILE_M, n_pad // TILE_K)
    return pl.pallas_call(
        gcn_layer1_kernel,
        out_shape=(
            jax.ShapeDtypeStruct((n_pad, hpad), jnp.float32),   # hidden (pre-BN)
            jax.ShapeDtypeStruct((n_pad, cpad), jnp.bfloat16),  # act @ W2
        ),
        grid_spec=pltpu.PrefetchScalarGridSpec(
            num_scalar_prefetch=0,
            grid=grid,
            in_specs=[
                pl.BlockSpec((TILE_M, TILE_K), lambda i, k: (i, k)),   # A1 tile
                pl.BlockSpec((TILE_K, fin),    lambda i, k: (k, 0)),   # X tile
                pl.BlockSpec((fin, hpad),      lambda i, k: (0, 0)),   # W1
                pl.BlockSpec((1, hpad),        lambda i, k: (0, 0)),   # b1
                pl.BlockSpec((1, hpad),        lambda i, k: (0, 0)),   # bn scale
                pl.BlockSpec((1, hpad),        lambda i, k: (0, 0)),   # bn shift
                pl.BlockSpec((hpad, cpad),     lambda i, k: (0, 0)),   # W2
            ],
            out_specs=(
                pl.BlockSpec((TILE_M, hpad), lambda i, k: (i, 0)),
                pl.BlockSpec((TILE_M, cpad), lambda i, k: (i, 0)),
            ),
            scratch_shapes=[pltpu.VMEM((TILE_M, fin), jnp.float32)],
        ),
        compiler_params=_COMPILER_PARAMS,
    )(a1, x, w1, b1, scale, shift, w2)


def gcn_layer2(a2, xw2, b2):
    n_pad = a2.shape[0]
    cpad = xw2.shape[1]
    grid = (n_pad // TILE_M, n_pad // TILE_K)
    return pl.pallas_call(
        gcn_layer2_kernel,
        out_shape=jax.ShapeDtypeStruct((n_pad, cpad), jnp.float32),
        grid_spec=pltpu.PrefetchScalarGridSpec(
            num_scalar_prefetch=0,
            grid=grid,
            in_specs=[
                pl.BlockSpec((TILE_M, TILE_K), lambda i, k: (i, k)),   # A2 tile
                pl.BlockSpec((TILE_K, cpad),   lambda i, k: (k, 0)),   # act @ W2
                pl.BlockSpec((1, cpad),        lambda i, k: (0, 0)),   # b2
            ],
            out_specs=pl.BlockSpec((TILE_M, cpad), lambda i, k: (i, 0)),
            scratch_shapes=[pltpu.VMEM((TILE_M, cpad), jnp.float32)],
        ),
        compiler_params=_COMPILER_PARAMS,
    )(a2, xw2, b2)


# ----------------------------------------------------------------------------
# Glue: dense symmetric-normalized adjacency (PyG gcn_norm, add_self_loops=True)
# built at padded size (padded rows/cols are zero).
# ----------------------------------------------------------------------------
def build_norm_adj(edge_index, num_nodes, num_nodes_pad):
    src, dst = edge_index[0], edge_index[1]
    loop = jnp.arange(num_nodes, dtype=edge_index.dtype)
    src = jnp.concatenate([src, loop])
    dst = jnp.concatenate([dst, loop])
    adj = jnp.zeros((num_nodes_pad, num_nodes_pad), jnp.float32).at[dst, src].add(1.0)
    deg = jnp.zeros((num_nodes_pad,), jnp.float32).at[dst].add(1.0)
    dinv = jnp.where(deg > 0, 1.0 / jnp.sqrt(deg), 0.0)
    return adj * dinv[:, None] * dinv[None, :]


# ----------------------------------------------------------------------------
# Full forward: returns (x_out, hidden) like the PyTorch module (eval mode)
# ----------------------------------------------------------------------------
def gcn_forward(x, edges, params):
    n, f_in = x.shape
    hid = params["w1"].shape[1]
    out_c = params["w2"].shape[1]

    n_pad = _round_up(n, max(TILE_M, TILE_K))
    fin_pad = _round_up(f_in, LANE)
    hid_pad = _round_up(hid, LANE)
    out_pad = _round_up(out_c, LANE)

    (ei1, _), (ei2, _) = edges
    a1 = build_norm_adj(ei1, n, n_pad).astype(jnp.bfloat16)
    a2 = build_norm_adj(ei2, n, n_pad).astype(jnp.bfloat16)

    x_p = jnp.zeros((n_pad, fin_pad), jnp.bfloat16)
    x_p = x_p.at[:n, :f_in].set(x.astype(jnp.bfloat16))

    w1_p = jnp.zeros((fin_pad, hid_pad), jnp.float32).at[:f_in, :hid].set(params["w1"])
    b1_p = jnp.zeros((1, hid_pad), jnp.float32).at[:, :hid].set(params["b1"])
    w2_p = jnp.zeros((hid_pad, out_pad), jnp.float32).at[:hid, :out_c].set(params["w2"])
    b2_p = jnp.zeros((1, out_pad), jnp.float32).at[:, :out_c].set(params["b2"])

    # Fold BatchNorm1d (eval mode -> running stats) into a single scale/shift.
    scale = params["bn_gamma"] * jax.lax.rsqrt(params["bn_var"] + BN_EPS)
    shift = params["bn_beta"] - params["bn_mean"] * scale
    scale_p = jnp.zeros((1, hid_pad), jnp.float32).at[:, :hid].set(scale)
    shift_p = jnp.zeros((1, hid_pad), jnp.float32).at[:, :hid].set(shift)

    hidden_p, aw2_p = gcn_layer1(a1, x_p, w1_p, b1_p, scale_p, shift_p, w2_p)
    out_p = gcn_layer2(a2, aw2_p, b2_p)

    return out_p[:n, :out_c], hidden_p[:n, :hid]


# ----------------------------------------------------------------------------
# Pure-JAX reference (f32) for a loose correctness check
# ----------------------------------------------------------------------------
def gcn_reference(x, edges, params):
    n = x.shape[0]
    (ei1, _), (ei2, _) = edges
    a1 = build_norm_adj(ei1, n, n)
    a2 = build_norm_adj(ei2, n, n)
    h = a1 @ (x @ params["w1"]) + params["b1"]
    scale = params["bn_gamma"] * jax.lax.rsqrt(params["bn_var"] + BN_EPS)
    shift = params["bn_beta"] - params["bn_mean"] * scale
    act = jnp.maximum(h * scale + shift, 0.0)
    out = a2 @ (act @ params["w2"]) + params["b2"]
    return out, h


# ----------------------------------------------------------------------------
# Deterministic parameter init (shapes implied by GCN.__init__)
# ----------------------------------------------------------------------------
def init_params(key, in_channels, hidden_channels, out_channels):
    k1, k2 = jax.random.split(key)

    def glorot(k, fan_in, fan_out):
        lim = jnp.sqrt(6.0 / (fan_in + fan_out))
        return jax.random.uniform(k, (fan_in, fan_out), jnp.float32, -lim, lim)

    return {
        "w1": glorot(k1, in_channels, hidden_channels),
        "b1": jnp.zeros((1, hidden_channels), jnp.float32),
        "w2": glorot(k2, hidden_channels, out_channels),
        "b2": jnp.zeros((1, out_channels), jnp.float32),
        # BatchNorm1d defaults (eval mode -> running stats)
        "bn_gamma": jnp.ones((1, hidden_channels), jnp.float32),
        "bn_beta": jnp.zeros((1, hidden_channels), jnp.float32),
        "bn_mean": jnp.zeros((1, hidden_channels), jnp.float32),
        "bn_var": jnp.ones((1, hidden_channels), jnp.float32),
    }


if __name__ == "__main__":
    key = jax.random.PRNGKey(0)
    N, IN_C, HID_C, OUT_C, E = 200, 16, 32, 8, 600  # N pads to 256 -> 2x2 grid

    k_x, k_e1, k_e2, k_p = jax.random.split(key, 4)
    x = jax.random.normal(k_x, (N, IN_C), jnp.float32)

    edge_index1 = jax.random.randint(k_e1, (2, E), 0, N, jnp.int32)
    edge_index2 = jax.random.randint(k_e2, (2, E), 0, N, jnp.int32)
    edges = [(edge_index1, None), (edge_index2, None)]

    params = init_params(k_p, IN_C, HID_C, OUT_C)

    x_out, hidden = gcn_forward(x, edges, params)
    jax.block_until_ready((x_out, hidden))

    assert x_out.shape == (N, OUT_C) and hidden.shape == (N, HID_C)

    # Loose check vs. f32 reference (aggregation inputs are bf16 in the kernel).
    ref_out, ref_hidden = gcn_reference(x, edges, params)
    np.testing.assert_allclose(np.asarray(hidden), np.asarray(ref_hidden),
                               rtol=1e-1, atol=1e-1)
    np.testing.assert_allclose(np.asarray(x_out), np.asarray(ref_out),
                               rtol=1e-1, atol=1e-1)

    print("KERNEL_OK")
</pallas_src>

<mosaic_0001>
module attributes {stable_mosaic.version = 11 : i64} {
  func.func @gcn_layer1_kernel(%arg0: i32, %arg1: i32, %arg2: memref<128x128xbf16, #tpu.memory_space<vmem>>, %arg3: memref<128x128xbf16, #tpu.memory_space<vmem>>, %arg4: memref<128x128xf32, #tpu.memory_space<vmem>>, %arg5: memref<1x128xf32, #tpu.memory_space<vmem>>, %arg6: memref<1x128xf32, #tpu.memory_space<vmem>>, %arg7: memref<1x128xf32, #tpu.memory_space<vmem>>, %arg8: memref<128x128xf32, #tpu.memory_space<vmem>>, %arg9: memref<128x128xf32, #tpu.memory_space<vmem>>, %arg10: memref<128x128xbf16, #tpu.memory_space<vmem>>, %arg11: memref<128x128xf32, #tpu.memory_space<vmem>>) attributes {dimension_semantics = [#tpu.dimension_semantics<parallel>, #tpu.dimension_semantics<arbitrary>], iteration_bounds = array<i64: 2, 2>, scalar_prefetch = 0 : i64, scratch_operands = 1 : i64, tpu.core_type = #tpu.core_type<tc>, window_params = [{transform_indices = @transform_0, window_bounds = array<i64: 128, 128>}, {transform_indices = @transform_1, window_bounds = array<i64: 128, 128>}, {pipeline_mode = #tpu.pipeline_mode<synchronous>, transform_indices = @transform_2, window_bounds = array<i64: 128, 128>}, {pipeline_mode = #tpu.pipeline_mode<synchronous>, transform_indices = @transform_3, window_bounds = array<i64: 1, 128>}, {pipeline_mode = #tpu.pipeline_mode<synchronous>, transform_indices = @transform_4, window_bounds = array<i64: 1, 128>}, {pipeline_mode = #tpu.pipeline_mode<synchronous>, transform_indices = @transform_5, window_bounds = array<i64: 1, 128>}, {pipeline_mode = #tpu.pipeline_mode<synchronous>, transform_indices = @transform_6, window_bounds = array<i64: 128, 128>}, {transform_indices = @transform_7, window_bounds = array<i64: 128, 128>}, {transform_indices = @transform_8, window_bounds = array<i64: 128, 128>}]} {
    %c0_i32 = arith.constant 0 : i32
    %0 = arith.cmpi eq, %arg1, %c0_i32 : i32
    %1 = arith.extui %0 : i1 to i32
    %c0_i32_0 = arith.constant 0 : i32
    %2 = arith.cmpi ne, %1, %c0_i32_0 : i32
    scf.if %2 {
      %cst_9 = arith.constant 0.000000e+00 : f32
      %12 = vector.broadcast %cst_9 : f32 to vector<128x128xf32>
      %c0_10 = arith.constant 0 : index
      %c0_11 = arith.constant 0 : index
      %13 = vector.load %arg11[%c0_10, %c0_11] : memref<128x128xf32, #tpu.memory_space<vmem>>, vector<128x128xf32>
      tpu.vector_store %arg11[%c0_10, %c0_11], %12 {strides = array<i32>} : memref<128x128xf32, #tpu.memory_space<vmem>>, vector<128x128xf32>,
    } else {
    }
    %c0 = arith.constant 0 : index
    %c0_1 = arith.constant 0 : index
    %3 = vector.load %arg11[%c0, %c0_1] : memref<128x128xf32, #tpu.memory_space<vmem>>, vector<128x128xf32>
    %c0_2 = arith.constant 0 : index
    %c0_3 = arith.constant 0 : index
    %4 = vector.load %arg2[%c0_2, %c0_3] : memref<128x128xbf16, #tpu.memory_space<vmem>>, vector<128x128xbf16>
    %c0_4 = arith.constant 0 : index
    %c0_5 = arith.constant 0 : index
    %5 = vector.load %arg3[%c0_4, %c0_5] : memref<128x128xbf16, #tpu.memory_space<vmem>>, vector<128x128xbf16>
    %cst = arith.constant dense<0.000000e+00> : vector<128x128xf32>
    %6 = tpu.matmul %4, %5, %cst {dimension_numbers = #tpu.dot_dimension_numbers<[1], [0], [0], [1], [0, 0, 1, 1], [], []>} : vector<128x128xbf16>, vector<128x128xbf16>, vector<128x128xf32> -> vector<128x128xf32>
    %7 = arith.addf %3, %6 : vector<128x128xf32>
    %c0_6 = arith.constant 0 : index
    %c0_7 = arith.constant 0 : index
    %8 = vector.load %arg11[%c0_6, %c0_7] : memref<128x128xf32, #tpu.memory_space<vmem>>, vector<128x128xf32>
    tpu.vector_store %arg11[%c0_6, %c0_7], %7 {strides = array<i32>} : memref<128x128xf32, #tpu.memory_space<vmem>>, vector<128x128xf32>,
    %c1_i32 = arith.constant 1 : i32
    %9 = arith.cmpi eq, %arg1, %c1_i32 : i32
    %10 = arith.extui %9 : i1 to i32
    %c0_i32_8 = arith.constant 0 : i32
    %11 = arith.cmpi ne, %10, %c0_i32_8 : i32
    scf.if %11 {
      %c0_9 = arith.constant 0 : index
      %c0_10 = arith.constant 0 : index
      %12 = vector.load %arg11[%c0_9, %c0_10] : memref<128x128xf32, #tpu.memory_space<vmem>>, vector<128x128xf32>
      %c0_11 = arith.constant 0 : index
      %c0_12 = arith.constant 0 : index
      %13 = vector.load %arg4[%c0_11, %c0_12] : memref<128x128xf32, #tpu.memory_space<vmem>>, vector<128x128xf32>
      %cst_13 = arith.constant dense<0.000000e+00> : vector<128x128xf32>
      %14 = tpu.matmul %12, %13, %cst_13 {dimension_numbers = #tpu.dot_dimension_numbers<[1], [0], [0], [1], [0, 0, 1, 1], [], []>} : vector<128x128xf32>, vector<128x128xf32>, vector<128x128xf32> -> vector<128x128xf32>
      %c0_14 = arith.constant 0 : index
      %c0_15 = arith.constant 0 : index
      %15 = vector.load %arg5[%c0_14, %c0_15] : memref<1x128xf32, #tpu.memory_space<vmem>>, vector<1x128xf32>
      %16 = vector.broadcast %15 : vector<1x128xf32> to vector<128x128xf32>
      %17 = arith.addf %14, %16 : vector<128x128xf32>
      %c0_16 = arith.constant 0 : index
      %c0_17 = arith.constant 0 : index
      %18 = vector.load %arg9[%c0_16, %c0_17] : memref<128x128xf32, #tpu.memory_space<vmem>>, vector<128x128xf32>
      tpu.vector_store %arg9[%c0_16, %c0_17], %17 {strides = array<i32>} : memref<128x128xf32, #tpu.memory_space<vmem>>, vector<128x128xf32>,
      %c0_18 = arith.constant 0 : index
      %c0_19 = arith.constant 0 : index
      %19 = vector.load %arg6[%c0_18, %c0_19] : memref<1x128xf32, #tpu.memory_space<vmem>>, vector<1x128xf32>
      %20 = vector.broadcast %19 : vector<1x128xf32> to vector<128x128xf32>
      %21 = arith.mulf %17, %20 : vector<128x128xf32>
      %c0_20 = arith.constant 0 : index
      %c0_21 = arith.constant 0 : index
      %22 = vector.load %arg7[%c0_20, %c0_21] : memref<1x128xf32, #tpu.memory_space<vmem>>, vector<1x128xf32>
      %23 = vector.broadcast %22 : vector<1x128xf32> to vector<128x128xf32>
      %24 = arith.addf %21, %23 : vector<128x128xf32>
      %cst_22 = arith.constant 0.000000e+00 : f32
      %25 = vector.broadcast %cst_22 : f32 to vector<128x128xf32>
      %26 = arith.maximumf %24, %25 : vector<128x128xf32>
      %c0_23 = arith.constant 0 : index
      %c0_24 = arith.constant 0 : index
      %27 = vector.load %arg8[%c0_23, %c0_24] : memref<128x128xf32, #tpu.memory_space<vmem>>, vector<128x128xf32>
      %cst_25 = arith.constant dense<0.000000e+00> : vector<128x128xf32>
      %28 = tpu.matmul %26, %27, %cst_25 {dimension_numbers = #tpu.dot_dimension_numbers<[1], [0], [0], [1], [0, 0, 1, 1], [], []>} : vector<128x128xf32>, vector<128x128xf32>, vector<128x128xf32> -> vector<128x128xf32>
      %29 = arith.truncf %28 : vector<128x128xf32> to vector<128x128xbf16>
      %c0_26 = arith.constant 0 : index
      %c0_27 = arith.constant 0 : index
      %30 = vector.load %arg10[%c0_26, %c0_27] : memref<128x128xbf16, #tpu.memory_space<vmem>>, vector<128x128xbf16>
      tpu.vector_store %arg10[%c0_26, %c0_27], %29 {strides = array<i32>} : memref<128x128xbf16, #tpu.memory_space<vmem>>, vector<128x128xbf16>,
    } else {
    }
    return
  }
  func.func @transform_0(%arg0: i32, %arg1: i32) -> (i32, i32) {
    %c0_i32 = arith.constant 0 : i32
    return %arg0, %arg1 : i32, i32
  }
  func.func @transform_1(%arg0: i32, %arg1: i32) -> (i32, i32) {
    %c0_i32 = arith.constant 0 : i32
    %c0_i32_0 = arith.constant 0 : i32
    return %arg1, %c0_i32 : i32, i32
  }
  func.func @transform_2(%arg0: i32, %arg1: i32) -> (i32, i32) {
    %c0_i32 = arith.constant 0 : i32
    %c0_i32_0 = arith.constant 0 : i32
    %c0_i32_1 = arith.constant 0 : i32
    return %c0_i32, %c0_i32_0 : i32, i32
  }
  func.func @transform_3(%arg0: i32, %arg1: i32) -> (i32, i32) {
    %c0_i32 = arith.constant 0 : i32
    %c0_i32_0 = arith.constant 0 : i32
    %c0_i32_1 = arith.constant 0 : i32
    return %c0_i32, %c0_i32_0 : i32, i32
  }
  func.func @transform_4(%arg0: i32, %arg1: i32) -> (i32, i32) {
    %c0_i32 = arith.constant 0 : i32
    %c0_i32_0 = arith.constant 0 : i32
    %c0_i32_1 = arith.constant 0 : i32
    return %c0_i32, %c0_i32_0 : i32, i32
  }
  func.func @transform_5(%arg0: i32, %arg1: i32) -> (i32, i32) {
    %c0_i32 = arith.constant 0 : i32
    %c0_i32_0 = arith.constant 0 : i32
    %c0_i32_1 = arith.constant 0 : i32
    return %c0_i32, %c0_i32_0 : i32, i32
  }
  func.func @transform_6(%arg0: i32, %arg1: i32) -> (i32, i32) {
    %c0_i32 = arith.constant 0 : i32
    %c0_i32_0 = arith.constant 0 : i32
    %c0_i32_1 = arith.constant 0 : i32
    return %c0_i32, %c0_i32_0 : i32, i32
  }
  func.func @transform_7(%arg0: i32, %arg1: i32) -> (i32, i32) {
    %c0_i32 = arith.constant 0 : i32
    %c0_i32_0 = arith.constant 0 : i32
    return %arg0, %c0_i32 : i32, i32
  }
  func.func @transform_8(%arg0: i32, %arg1: i32) -> (i32, i32) {
    %c0_i32 = arith.constant 0 : i32
    %c0_i32_0 = arith.constant 0 : i32
    return %arg0, %c0_i32 : i32, i32
  }
}

</mosaic_0001>

<llo_original>
// kernel: tpu_custom_call.1
$region0: #{tpu_custom_call.1}
  #allocation0 [shape = 'u32[]', space=smem, size = 0x4, offset = 0x4, fixed_abs, tag = 'smem constant byte address 0x4 - core index']
  #allocation1 [shape = 'u32[144,128]{1,0:T(1,128)}', space=vmem, size = 0x12000, scoped, tag = 'internal scratch']
  #allocation2 [shape = 'f32[128,128]{1,0:T(8,128)}', space=vmem, size = 0x10000, scoped, tag = 'scratch operand']
  %s0 = inlined_call_operand.hbm [shape: bf16[256,256], index: 0, kind: input, shape index: {}]
  %s1 = inlined_call_operand.hbm [shape: bf16[256,128], index: 1, kind: input, shape index: {}]
  %s2 = inlined_call_operand.hbm [shape: f32[128,128], index: 2, kind: input, shape index: {}]
  %s3 = inlined_call_operand.vmem [shape: f32[1,128], index: 3, kind: input, shape index: {}]
  %s4 = inlined_call_operand.vmem [shape: f32[1,128], index: 4, kind: input, shape index: {}]
  %s5 = inlined_call_operand.vmem [shape: f32[1,128], index: 5, kind: input, shape index: {}]
  %s6 = inlined_call_operand.hbm [shape: f32[128,128], index: 6, kind: input, shape index: {}]
  %s7 = inlined_call_operand.hbm [shape: f32[256,128], index: 7, kind: output, shape index: {0}]
  %s8 = inlined_call_operand.hbm [shape: bf16[256,128], index: 8, kind: output, shape index: {1}]
  %9 = xla_tuple %s7, %s8
  %s10 = sld [smem:[#allocation0]]
  $region93: #{tpu_custom_call.1} parent=0
    _
  %s12 = ssub.s32 1, %s10
  %s13 = scalar_select 0, %s12, %s10
  $region1: #{tpu_custom_call.1} parent=0
    #allocation3 [shape = 'u8[65536]{0}', space=vmem, size = 0x10000, scoped, tag = 'input window, operand 0']
    #allocation4 [shape = 's32[2]{0}', space=sflag, size = 0x8, scoped, tag = 'scoped memory for tpu_custom_call.1']
    #allocation5 [shape = 's32[2]{0}', space=sflag, size = 0x8, scoped, tag = 'scoped memory for tpu_custom_call.1']
    #allocation6 [shape = 'u8[65536]{0}', space=vmem, size = 0x10000, scoped, tag = 'input window, operand 1']
    #allocation7 [shape = 's32[2]{0}', space=sflag, size = 0x8, scoped, tag = 'scoped memory for tpu_custom_call.1']
    #allocation8 [shape = 'u8[65536]{0}', space=vmem, size = 0x10000, scoped, tag = 'input window, operand 2, single buffered']
    #allocation9 [shape = 'u8[65536]{0}', space=vmem, size = 0x10000, scoped, tag = 'input window, operand 6, single buffered']
    #allocation10 [shape = 's32[1]{0}', space=sflag, size = 0x4, scoped, tag = 'scoped memory for tpu_custom_call.1']
    #allocation11 [shape = 'u8[131072]{0}', space=vmem, size = 0x20000, scoped, tag = 'output window, operand 0']
    #allocation12 [shape = 'u8[65536]{0}', space=vmem, size = 0x10000, scoped, tag = 'output window, operand 1']
    #allocation13 [shape = 's32[2]{0}', space=sflag, size = 0x8, scoped, tag = 'scoped memory for tpu_custom_call.1']
    %14 = vsyncpa [#allocation4], 0
    %s15 = scalar_lea.sflag [#allocation4], 1
    %16 = vsyncpa %s15, 0
    %17 = vsyncpa [#allocation7], 0
    %s18 = scalar_lea.sflag [#allocation7], 1
    %19 = vsyncpa %s18, 0
    %20 = vsyncpa [#allocation10], 0
    %21 = vsyncpa [#allocation5], 0
    %s22 = scalar_lea.sflag [#allocation5], 1
    %23 = vsyncpa %s22, 0
    %24 = vsyncpa [#allocation13], 0
    %s25 = scalar_lea.sflag [#allocation13], 1
    %26 = vsyncpa %s25, 0
    loop: start=0, step=1, limit=6
    $region2: #{tpu_custom_call.1} parent=1 // loop_pre_header
      _
    $region3: #{tpu_custom_call.1} parent=1 // loop_header
      %s28 = sphi 0, %s32
      %p29 = scmp.ge.s32.totalorder %s28, 6
      %s35 = sphi 0, %s47
      %s36 = sphi 0, %s43
      %s37 = sphi 0, %s35
      %s38 = sphi 0, %s36
      %s39 = sphi 0, %s37
      %s40 = sphi 0, %s38
      %s52 = sphi 0, %s54
      %s55 = sphi 0, %s52
      %s56 = sphi 0, %s55
      %s72 = sphi 0, %s56
      %s78 = sphi 0, %s80
      %s81 = sphi 0, %s78
      %s82 = sphi 0, %s81
      %s98 = sphi 0, %s82
      %s102 = sphi 0, %s102
      %s104 = sphi 0, %s102
      %s105 = sphi 0, %s104
      %s119 = sphi 0, %s105
      %s123 = sphi 0, %s123
      %s125 = sphi 0, %s123
      %s126 = sphi 0, %s125
      %s140 = sphi 0, %s126
      %s144 = sphi 0, %s144
      %s146 = sphi 0, %s144
      %s147 = sphi 0, %s146
      %s161 = sphi 0, %s147
      %s165 = sphi 0, %s165
      %s167 = sphi 0, %s165
      %s168 = sphi 0, %s167
      %s182 = sphi 0, %s168
      %s186 = sphi 0, %s186
      %s188 = sphi 0, %s186
      %s189 = sphi 0, %s188
      %s203 = sphi 0, %s189
      %s209 = sphi 0, %s211
      %s212 = sphi 0, %s209
      %s213 = sphi 0, %s212
      %s229 = sphi 0, %s213
      %s235 = sphi 0, %s237
      %s238 = sphi 0, %s235
      %s239 = sphi 0, %s238
      %s255 = sphi 0, %s239
    $region4: #{tpu_custom_call.1} parent=1 // loop_header_branch
      %31 = sbr.rel (%p29) target = $region8
    $region5: #{tpu_custom_call.1} parent=1 // loop_body
      %s33 = ssub.s32 %s28, 1
      %s34 = ssub.s32 %s28, 2
      %s41 = sadd.s32 1, %s36
      %p42 = scmp.ge.s32.totalorder %s41, 2
      %s43 = scalar_select %p42, 0, %s41
      %s44 = sadd.s32 1, %s35
      %s45 = scalar_select %p42, %s44, %s35
      %p46 = scmp.ge.s32.totalorder %s45, 2
      %s47 = scalar_select %p46, 0, %s45
      %s48 = ssub.s32 %s35, %s47
      %s49 = ssub.s32 %s36, %s43
      %s50 = sor.u32 %s48, %s49
      %p51 = scmp.eq.s32.totalorder %s50, 0
      %s53 = sadd.s32 %s52, 1
      %s54 = scalar_select %p51, %s52, %s53
      %p57 = pneg %p51
      %p58 = scmp.eq.s32.totalorder %s28, 3
      %p59 = por %p57, %p58
      %p60 = scmp.ne.s32.totalorder %s52, %s55
      %p61 = scmp.eq.s32.totalorder %s28, 0
      %p62 = por %p60, %p61
      %p63 = scmp.ne.s32.totalorder %s52, %s55
      %p64 = scmp.eq.s32.totalorder %s33, 3
      %p65 = por %p63, %p64
      %p66 = scmp.ne.s32.totalorder %s55, %s56
      %p67 = scmp.eq.s32.totalorder %s33, 0
      %p68 = por %p66, %p67
      %p69 = scmp.ne.s32.totalorder %s55, %s56
      %p70 = scmp.eq.s32.totalorder %s34, 3
      %p71 = por %p69, %p70
      %p73 = scmp.ne.s32.totalorder %s56, %s72
      %p74 = scmp.eq.s32.totalorder %s34, 0
      %p75 = por %p73, %p74
      %s76 = ssub.s32 %s36, %s43
      %p77 = scmp.eq.s32.totalorder %s76, 0
      %s79 = sadd.s32 %s78, 1
      %s80 = scalar_select %p77, %s78, %s79
      %p83 = pneg %p77
      %p84 = scmp.eq.s32.totalorder %s28, 3
      %p85 = por %p83, %p84
      %p86 = scmp.ne.s32.totalorder %s78, %s81
      %p87 = scmp.eq.s32.totalorder %s28, 0
      %p88 = por %p86, %p87
      %p89 = scmp.ne.s32.totalorder %s78, %s81
      %p90 = scmp.eq.s32.totalorder %s33, 3
      %p91 = por %p89, %p90
      %p92 = scmp.ne.s32.totalorder %s81, %s82
      %p93 = scmp.eq.s32.totalorder %s33, 0
      %p94 = por %p92, %p93
      %p95 = scmp.ne.s32.totalorder %s81, %s82
      %p96 = scmp.eq.s32.totalorder %s34, 3
      %p97 = por %p95, %p96
      %p99 = scmp.ne.s32.totalorder %s82, %s98
      %p100 = scmp.eq.s32.totalorder %s34, 0
      %p101 = por %p99, %p100
      %s103 = sadd.s32 %s102, 1
      %p106 = scmp.eq.s32.totalorder %s28, 3
      %p107 = scmp.ne.s32.totalorder %s102, %s104
      %p108 = scmp.eq.s32.totalorder %s28, 0
      %p109 = por %p107, %p108
      %p110 = scmp.ne.s32.totalorder %s102, %s104
      %p111 = scmp.eq.s32.totalorder %s33, 3
      %p112 = por %p110, %p111
      %p113 = scmp.ne.s32.totalorder %s104, %s105
      %p114 = scmp.eq.s32.totalorder %s33, 0
      %p115 = por %p113, %p114
      %p116 = scmp.ne.s32.totalorder %s104, %s105
      %p117 = scmp.eq.s32.totalorder %s34, 3
      %p118 = por %p116, %p117
      %p120 = scmp.ne.s32.totalorder %s105, %s119
      %p121 = scmp.eq.s32.totalorder %s34, 0
      %p122 = por %p120, %p121
      %s124 = sadd.s32 %s123, 1
      %p127 = scmp.eq.s32.totalorder %s28, 3
      %p128 = scmp.ne.s32.totalorder %s123, %s125
      %p129 = scmp.eq.s32.totalorder %s28, 0
      %p130 = por %p128, %p129
      %p131 = scmp.ne.s32.totalorder %s123, %s125
      %p132 = scmp.eq.s32.totalorder %s33, 3
      %p133 = por %p131, %p132
      %p134 = scmp.ne.s32.totalorder %s125, %s126
      %p135 = scmp.eq.s32.totalorder %s33, 0
      %p136 = por %p134, %p135
      %p137 = scmp.ne.s32.totalorder %s125, %s126
      %p138 = scmp.eq.s32.totalorder %s34, 3
      %p139 = por %p137, %p138
      %p141 = scmp.ne.s32.totalorder %s126, %s140
      %p142 = scmp.eq.s32.totalorder %s34, 0
      %p143 = por %p141, %p142
      %s145 = sadd.s32 %s144, 1
      %p148 = scmp.eq.s32.totalorder %s28, 3
      %p149 = scmp.ne.s32.totalorder %s144, %s146
      %p150 = scmp.eq.s32.totalorder %s28, 0
      %p151 = por %p149, %p150
      %p152 = scmp.ne.s32.totalorder %s144, %s146
      %p153 = scmp.eq.s32.totalorder %s33, 3
      %p154 = por %p152, %p153
      %p155 = scmp.ne.s32.totalorder %s146, %s147
      %p156 = scmp.eq.s32.totalorder %s33, 0
      %p157 = por %p155, %p156
      %p158 = scmp.ne.s32.totalorder %s146, %s147
      %p159 = scmp.eq.s32.totalorder %s34, 3
      %p160 = por %p158, %p159
      %p162 = scmp.ne.s32.totalorder %s147, %s161
      %p163 = scmp.eq.s32.totalorder %s34, 0
      %p164 = por %p162, %p163
      %s166 = sadd.s32 %s165, 1
      %p169 = scmp.eq.s32.totalorder %s28, 3
      %p170 = scmp.ne.s32.totalorder %s165, %s167
      %p171 = scmp.eq.s32.totalorder %s28, 0
      %p172 = por %p170, %p171
      %p173 = scmp.ne.s32.totalorder %s165, %s167
      %p174 = scmp.eq.s32.totalorder %s33, 3
      %p175 = por %p173, %p174
      %p176 = scmp.ne.s32.totalorder %s167, %s168
      %p177 = scmp.eq.s32.totalorder %s33, 0
      %p178 = por %p176, %p177
      %p179 = scmp.ne.s32.totalorder %s167, %s168
      %p180 = scmp.eq.s32.totalorder %s34, 3
      %p181 = por %p179, %p180
      %p183 = scmp.ne.s32.totalorder %s168, %s182
      %p184 = scmp.eq.s32.totalorder %s34, 0
      %p185 = por %p183, %p184
      %s187 = sadd.s32 %s186, 1
      %p190 = scmp.eq.s32.totalorder %s28, 3
      %p191 = scmp.ne.s32.totalorder %s186, %s188
      %p192 = scmp.eq.s32.totalorder %s28, 0
      %p193 = por %p191, %p192
      %p194 = scmp.ne.s32.totalorder %s186, %s188
      %p195 = scmp.eq.s32.totalorder %s33, 3
      %p196 = por %p194, %p195
      %p197 = scmp.ne.s32.totalorder %s188, %s189
      %p198 = scmp.eq.s32.totalorder %s33, 0
      %p199 = por %p197, %p198
      %p200 = scmp.ne.s32.totalorder %s188, %s189
      %p201 = scmp.eq.s32.totalorder %s34, 3
      %p202 = por %p200, %p201
      %p204 = scmp.ne.s32.totalorder %s189, %s203
      %p205 = scmp.eq.s32.totalorder %s34, 0
      %p206 = por %p204, %p205
      %s207 = ssub.s32 %s35, %s47
      %p208 = scmp.eq.s32.totalorder %s207, 0
      %s210 = sadd.s32 %s209, 1
      %s211 = scalar_select %p208, %s209, %s210
      %p214 = pneg %p208
      %p215 = scmp.eq.s32.totalorder %s28, 3
      %p216 = por %p214, %p215
      %p217 = scmp.ne.s32.totalorder %s209, %s212
      %p218 = scmp.eq.s32.totalorder %s28, 0
      %p219 = por %p217, %p218
      %p220 = scmp.ne.s32.totalorder %s209, %s212
      %p221 = scmp.eq.s32.totalorder %s33, 3
      %p222 = por %p220, %p221
      %p223 = scmp.ne.s32.totalorder %s212, %s213
      %p224 = scmp.eq.s32.totalorder %s33, 0
      %p225 = por %p223, %p224
      %p226 = scmp.ne.s32.totalorder %s212, %s213
      %p227 = scmp.eq.s32.totalorder %s34, 3
      %p228 = por %p226, %p227
      %p230 = scmp.ne.s32.totalorder %s213, %s229
      %p231 = scmp.eq.s32.totalorder %s34, 0
      %p232 = por %p230, %p231
      %s233 = ssub.s32 %s35, %s47
      %p234 = scmp.eq.s32.totalorder %s233, 0
      %s236 = sadd.s32 %s235, 1
      %s237 = scalar_select %p234, %s235, %s236
      %p240 = pneg %p234
      %p241 = scmp.eq.s32.totalorder %s28, 3
      %p242 = por %p240, %p241
      %p243 = scmp.ne.s32.totalorder %s235, %s238
      %p244 = scmp.eq.s32.totalorder %s28, 0
      %p245 = por %p243, %p244
      %p246 = scmp.ne.s32.totalorder %s235, %s238
      %p247 = scmp.eq.s32.totalorder %s33, 3
      %p248 = por %p246, %p247
      %p249 = scmp.ne.s32.totalorder %s238, %s239
      %p250 = scmp.eq.s32.totalorder %s33, 0
      %p251 = por %p249, %p250
      %p252 = scmp.ne.s32.totalorder %s238, %s239
      %p253 = scmp.eq.s32.totalorder %s34, 3
      %p254 = por %p252, %p253
      %p256 = scmp.ne.s32.totalorder %s239, %s255
      %p257 = scmp.eq.s32.totalorder %s34, 0
      %p258 = por %p256, %p257
      %p259 = scmp.le.s32.totalorder 1, %s28
      %p260 = scmp.lt.s32.totalorder %s28, 5
      %p261 = pnand %p259, %p260
      %p262 = pneg %p261
      // Predicated region
      $region9: #{tpu_custom_call.1} parent=5 // pred_check
        _
      $region10: #{tpu_custom_call.1} parent=5 // pred_check_branch
        %264 = sbr.rel (%p261) target = $region12
      $region11: #{tpu_custom_call.1} parent=5 // pred_region
        %s265 = ssub.s32 %s28, 1
        // Predicated region
        $region13: #{tpu_custom_call.1} parent=11 // pred_check
          %p266 = pneg %p115
        $region14: #{tpu_custom_call.1} parent=11 // pred_check_branch
          %268 = sbr.rel (%p266) target = $region16
        $region15: #{tpu_custom_call.1} parent=11 // pred_region
          %s270 = ssub.s32 2048, 2048
          %271 = vsyncadd [#allocation7], %s270
          %s272 = sshll.u32 [#allocation8], 4
          %s273 = int_to_ptr.vmem [resolvable:$true] %s272
          %278 = dma.hbm_to_vmem [thread:$0]  %s2, 2048, %s273, [#allocation7], 128, 128, 8
        $region16: #{tpu_custom_call.1} parent=11 // pred_fallthru
          _
        // Predicated region
        $region17: #{tpu_custom_call.1} parent=11 // pred_check
          %p279 = pneg %p136
        $region18: #{tpu_custom_call.1} parent=11 // pred_check_branch
          %281 = sbr.rel (%p279) target = $region20
        $region19: #{tpu_custom_call.1} parent=11 // pred_region
          _
        $region20: #{tpu_custom_call.1} parent=11 // pred_fallthru
          _
        // Predicated region
        $region21: #{tpu_custom_call.1} parent=11 // pred_check
          %p282 = pneg %p157
        $region22: #{tpu_custom_call.1} parent=11 // pred_check_branch
          %284 = sbr.rel (%p282) target = $region24
        $region23: #{tpu_custom_call.1} parent=11 // pred_region
          _
        $region24: #{tpu_custom_call.1} parent=11 // pred_fallthru
          _
        // Predicated region
        $region25: #{tpu_custom_call.1} parent=11 // pred_check
          %p285 = pneg %p178
        $region26: #{tpu_custom_call.1} parent=11 // pred_check_branch
          %287 = sbr.rel (%p285) target = $region28
        $region27: #{tpu_custom_call.1} parent=11 // pred_region
          _
        $region28: #{tpu_custom_call.1} parent=11 // pred_fallthru
          _
        // Predicated region
        $region29: #{tpu_custom_call.1} parent=11 // pred_check
          %p288 = pneg %p199
        $region30: #{tpu_custom_call.1} parent=11 // pred_check_branch
          %290 = sbr.rel (%p288) target = $region32
        $region31: #{tpu_custom_call.1} parent=11 // pred_region
          %s292 = ssub.s32 2048, 2048
          %293 = vsyncadd [#allocation10], %s292
          %s294 = sshll.u32 [#allocation9], 4
          %s295 = int_to_ptr.vmem [resolvable:$true] %s294
          %300 = dma.hbm_to_vmem [thread:$0]  %s6, 2048, %s295, [#allocation10], 128, 128, 8
        $region32: #{tpu_custom_call.1} parent=11 // pred_fallthru
          _
      $region12: #{tpu_custom_call.1} parent=5 // pred_fallthru
        _
      %p301 = scmp.lt.s32.totalorder %s28, 4
      // Predicated region
      $region33: #{tpu_custom_call.1} parent=5 // pred_check
        %p302 = pneg %p301
      $region34: #{tpu_custom_call.1} parent=5 // pred_check_branch
        %304 = sbr.rel (%p302) target = $region36
      $region35: #{tpu_custom_call.1} parent=5 // pred_region
        // Predicated region
        $region37: #{tpu_custom_call.1} parent=35 // pred_check
          %p305 = pneg %p62
        $region38: #{tpu_custom_call.1} parent=35 // pred_check_branch
          %307 = sbr.rel (%p305) target = $region40
        $region39: #{tpu_custom_call.1} parent=35 // pred_region
          %s308 = sand.u32 %s52, 1
          %s309 = scalar_lea.sflag [#allocation4], %s308
          %s310 = sand.u32 %s52, 1
          %s311 = smul.addr %s310, 64
          %s312 = scalar_lea.vmem [#allocation3], %s311
          %s313 = smul.u32 16, %s35
          %s315 = ssub.s32 1024, 1024
          %316 = vsyncadd %s309, %s315
          %s317 = smul.addr %s313, 2
          %s318 = sadd.s32 %s36, %s317
          %s319 = smul.addr %s318, 64
          %s320 = scalar_lea.hbm %s0, %s319
          %s321 = sshll.u32 %s312, 4
          %s322 = int_to_ptr.vmem [resolvable:$true] %s321
          %327 = dma.hbm_to_vmem [thread:$0]  %s320, 1024, %s322, %s309, 128, 64, 4
        $region40: #{tpu_custom_call.1} parent=35 // pred_fallthru
          _
        // Predicated region
        $region41: #{tpu_custom_call.1} parent=35 // pred_check
          %p328 = pneg %p88
        $region42: #{tpu_custom_call.1} parent=35 // pred_check_branch
          %330 = sbr.rel (%p328) target = $region44
        $region43: #{tpu_custom_call.1} parent=35 // pred_region
          %s331 = sand.u32 %s28, 1
          %s332 = scalar_lea.sflag [#allocation7], %s331
          %s333 = sand.u32 %s78, 1
          %s334 = smul.addr %s333, 64
          %s335 = scalar_lea.vmem [#allocation6], %s334
          %s336 = smul.u32 16, %s36
          %s338 = ssub.s32 1024, 1024
          %339 = vsyncadd %s332, %s338
          %s340 = smul.addr %s336, 64
          %s341 = scalar_lea.hbm %s1, %s340
          %s342 = sshll.u32 %s335, 4
          %s343 = int_to_ptr.vmem [resolvable:$true] %s342
          %348 = dma.hbm_to_vmem [thread:$0]  %s341, 1024, %s343, %s332, 64, 64, 4
        $region44: #{tpu_custom_call.1} parent=35 // pred_fallthru
          _
      $region36: #{tpu_custom_call.1} parent=5 // pred_fallthru
        _
      %p349 = scmp.le.s32.totalorder 1, %s28
      %p350 = scmp.lt.s32.totalorder %s28, 5
      %p351 = pnand %p349, %p350
      %p352 = pneg %p351
      // Predicated region
      $region45: #{tpu_custom_call.1} parent=5 // pred_check
        _
      $region46: #{tpu_custom_call.1} parent=5 // pred_check_branch
        %354 = sbr.rel (%p351) target = $region48
      $region47: #{tpu_custom_call.1} parent=5 // pred_region
        %s355 = ssub.s32 %s28, 1
        %s356 = sand.u32 %s55, 1
        %s357 = scalar_lea.sflag [#allocation4], %s356
        %s358 = sand.u32 %s55, 1
        %s359 = smul.addr %s358, 64
        %s360 = scalar_lea.vmem [#allocation3], %s359
        // Predicated region
        $region49: #{tpu_custom_call.1} parent=47 // pred_check
          %p361 = pneg %p68
        $region50: #{tpu_custom_call.1} parent=47 // pred_check_branch
          %363 = sbr.rel (%p361) target = $region52
        $region51: #{tpu_custom_call.1} parent=47 // pred_region
          %364 = dma.done %s357, 1024
        $region52: #{tpu_custom_call.1} parent=47 // pred_fallthru
          _
        %s365 = sand.u32 %s33, 1
        %s366 = scalar_lea.sflag [#allocation7], %s365
        %s367 = sand.u32 %s81, 1
        %s368 = smul.addr %s367, 64
        %s369 = scalar_lea.vmem [#allocation6], %s368
        // Predicated region
        $region53: #{tpu_custom_call.1} parent=47 // pred_check
          %p370 = pneg %p94
        $region54: #{tpu_custom_call.1} parent=47 // pred_check_branch
          %372 = sbr.rel (%p370) target = $region56
        $region55: #{tpu_custom_call.1} parent=47 // pred_region
          %373 = dma.done %s366, 1024
        $region56: #{tpu_custom_call.1} parent=47 // pred_fallthru
          _
        // Predicated region
        $region57: #{tpu_custom_call.1} parent=47 // pred_check
          %p374 = pneg %p115
        $region58: #{tpu_custom_call.1} parent=47 // pred_check_branch
          %376 = sbr.rel (%p374) target = $region60
        $region59: #{tpu_custom_call.1} parent=47 // pred_region
          %377 = dma.done [#allocation7], 2048
        $region60: #{tpu_custom_call.1} parent=47 // pred_fallthru
          _
        // Predicated region
        $region61: #{tpu_custom_call.1} parent=47 // pred_check
          %p378 = pneg %p199
        $region62: #{tpu_custom_call.1} parent=47 // pred_check_branch
          %380 = sbr.rel (%p378) target = $region64
        $region63: #{tpu_custom_call.1} parent=47 // pred_region
          %381 = dma.done [#allocation10], 2048
        $region64: #{tpu_custom_call.1} parent=47 // pred_fallthru
          _
        %s382 = sand.u32 %s55, 1
        %s383 = scalar_lea.sflag [#allocation4], %s382
        %s384 = sand.u32 %s55, 1
        %s385 = smul.addr %s384, 64
        %s386 = scalar_lea.vmem [#allocation3], %s385
        %p387 = pneg %p68
        %p388 = pneg %p65
        %s389 = sand.u32 %s33, 1
        %s390 = scalar_lea.sflag [#allocation7], %s389
        %s391 = sand.u32 %s81, 1
        %s392 = smul.addr %s391, 64
        %s393 = scalar_lea.vmem [#allocation6], %s392
        %p394 = pneg %p94
        %p395 = pneg %p91
        %p396 = pneg %p115
        %p397 = pneg %p112
        %p398 = pneg %p136
        %p399 = pneg %p133
        %p400 = pneg %p157
        %p401 = pneg %p154
        %p402 = pneg %p178
        %p403 = pneg %p175
        %p404 = pneg %p199
        %p405 = pneg %p196
        %p406 = pneg %p225
        %p407 = pneg %p222
        %s408 = sand.u32 %s212, 1
        %s409 = scalar_lea.sflag [#allocation5], %s408
        %s410 = sand.u32 %s212, 1
        %s411 = smul.addr %s410, 128
        %s412 = scalar_lea.vmem [#allocation11], %s411
        %p413 = pneg %p251
        %p414 = pneg %p248
        %s415 = sand.u32 %s238, 1
        %s416 = scalar_lea.sflag [#allocation13], %s415
        %s417 = sand.u32 %s238, 1
        %s418 = smul.addr %s417, 64
        %s419 = scalar_lea.vmem [#allocation12], %s418
        %s420 = smul.u32 16, %s37
        %s421 = smul.u32 16, %s38
        %s422 = smul.u32 16, %s37
        %s423 = smul.u32 16, %s37
        %p425 = scmp.eq.s32.totalorder %s38, 0
        // Predicated region
        $region65: #{tpu_custom_call.1} parent=47 // pred_check
          %p426 = pneg %p425
        $region66: #{tpu_custom_call.1} parent=47 // pred_check_branch
          %428 = sbr.rel (%p426) target = $region68
        $region67: #{tpu_custom_call.1} parent=47 // pred_region
          %429 = vst [vmem:[#allocation2] sm:$0xff] 0.0
          %430 = vst [vmem:[#allocation2 + $0x8] sm:$0xff] 0.0
          %431 = vst [vmem:[#allocation2 + $0x10] sm:$0xff] 0.0
          %432 = vst [vmem:[#allocation2 + $0x18] sm:$0xff] 0.0
          %433 = vst [vmem:[#allocation2 + $0x20] sm:$0xff] 0.0
          %434 = vst [vmem:[#allocation2 + $0x28] sm:$0xff] 0.0
          %435 = vst [vmem:[#allocation2 + $0x30] sm:$0xff] 0.0
          %436 = vst [vmem:[#allocation2 + $0x38] sm:$0xff] 0.0
          %437 = vst [vmem:[#allocation2 + $0x40] sm:$0xff] 0.0
          %438 = vst [vmem:[#allocation2 + $0x48] sm:$0xff] 0.0
          %439 = vst [vmem:[#allocation2 + $0x50] sm:$0xff] 0.0
          %440 = vst [vmem:[#allocation2 + $0x58] sm:$0xff] 0.0
          %441 = vst [vmem:[#allocation2 + $0x60] sm:$0xff] 0.0
          %442 = vst [vmem:[#allocation2 + $0x68] sm:$0xff] 0.0
          %443 = vst [vmem:[#allocation2 + $0x70] sm:$0xff] 0.0
          %444 = vst [vmem:[#allocation2 + $0x78] sm:$0xff] 0.0
        $region68: #{tpu_custom_call.1} parent=47 // pred_fallthru
          _
        %v445 = vld [vmem:[#allocation2] sm:$0xff]
        %v446 = vld [vmem:[#allocation2 + $0x8] sm:$0xff]
        %v447 = vld [vmem:[#allocation2 + $0x10] sm:$0xff]
        %v448 = vld [vmem:[#allocation2 + $0x18] sm:$0xff]
        %v449 = vld [vmem:[#allocation2 + $0x20] sm:$0xff]
        %v450 = vld [vmem:[#allocation2 + $0x28] sm:$0xff]
        %v451 = vld [vmem:[#allocation2 + $0x30] sm:$0xff]
        %v452 = vld [vmem:[#allocation2 + $0x38] sm:$0xff]
        %v453 = vld [vmem:[#allocation2 + $0x40] sm:$0xff]
        %v454 = vld [vmem:[#allocation2 + $0x48] sm:$0xff]
        %v455 = vld [vmem:[#allocation2 + $0x50] sm:$0xff]
        %v456 = vld [vmem:[#allocation2 + $0x58] sm:$0xff]
        %v457 = vld [vmem:[#allocation2 + $0x60] sm:$0xff]
        %v458 = vld [vmem:[#allocation2 + $0x68] sm:$0xff]
        %v459 = vld [vmem:[#allocation2 + $0x70] sm:$0xff]
        %v460 = vld [vmem:[#allocation2 + $0x78] sm:$0xff]
        %v461 = vld [vmem:[%s360] sm:$0xf]
        %v462 = vld [vmem:[%s360 + $0x4] sm:$0xf]
        %v463 = vld [vmem:[%s360 + $0x8] sm:$0xf]
        %v464 = vld [vmem:[%s360 + $0xc] sm:$0xf]
        %v465 = vld [vmem:[%s360 + $0x10] sm:$0xf]
        %v466 = vld [vmem:[%s360 + $0x14] sm:$0xf]
        %v467 = vld [vmem:[%s360 + $0x18] sm:$0xf]
        %v468 = vld [vmem:[%s360 + $0x1c] sm:$0xf]
        %v469 = vld [vmem:[%s360 + $0x20] sm:$0xf]
        %v470 = vld [vmem:[%s360 + $0x24] sm:$0xf]
        %v471 = vld [vmem:[%s360 + $0x28] sm:$0xf]
        %v472 = vld [vmem:[%s360 + $0x2c] sm:$0xf]
        %v473 = vld [vmem:[%s360 + $0x30] sm:$0xf]
        %v474 = vld [vmem:[%s360 + $0x34] sm:$0xf]
        %v475 = vld [vmem:[%s360 + $0x38] sm:$0xf]
        %v476 = vld [vmem:[%s360 + $0x3c] sm:$0xf]
        %v477 = vld [vmem:[%s369] sm:$0xf]
        %v478 = vld [vmem:[%s369 + $0x4] sm:$0xf]
        %v479 = vld [vmem:[%s369 + $0x8] sm:$0xf]
        %v480 = vld [vmem:[%s369 + $0xc] sm:$0xf]
        %v481 = vld [vmem:[%s369 + $0x10] sm:$0xf]
        %v482 = vld [vmem:[%s369 + $0x14] sm:$0xf]
        %v483 = vld [vmem:[%s369 + $0x18] sm:$0xf]
        %v484 = vld [vmem:[%s369 + $0x1c] sm:$0xf]
        %v485 = vld [vmem:[%s369 + $0x20] sm:$0xf]
        %v486 = vld [vmem:[%s369 + $0x24] sm:$0xf]
        %v487 = vld [vmem:[%s369 + $0x28] sm:$0xf]
        %v488 = vld [vmem:[%s369 + $0x2c] sm:$0xf]
        %v489 = vld [vmem:[%s369 + $0x30] sm:$0xf]
        %v490 = vld [vmem:[%s369 + $0x34] sm:$0xf]
        %v491 = vld [vmem:[%s369 + $0x38] sm:$0xf]
        %v492 = vld [vmem:[%s369 + $0x3c] sm:$0xf]
        %v509 = vunpack.c.l.b16 %v461
        %v510 = vunpack.c.l.b16 %v462
        %v511 = vunpack.c.l.b16 %v463
        %v512 = vunpack.c.l.b16 %v464
        %v513 = vunpack.c.l.b16 %v465
        %v514 = vunpack.c.l.b16 %v466
        %v515 = vunpack.c.l.b16 %v467
        %v516 = vunpack.c.l.b16 %v468
        %v517 = vunpack.c.l.b16 %v469
        %v518 = vunpack.c.l.b16 %v470
        %v519 = vunpack.c.l.b16 %v471
        %v520 = vunpack.c.l.b16 %v472
        %v521 = vunpack.c.l.b16 %v473
        %v522 = vunpack.c.l.b16 %v474
        %v523 = vunpack.c.l.b16 %v475
        %v524 = vunpack.c.l.b16 %v476
        %v525 = vpack.c.b16 %v510, %v509
        %v526 = vpack.c.b16 %v512, %v511
        %v527 = vpack.c.b16 %v514, %v513
        %v528 = vpack.c.b16 %v516, %v515
        %v529 = vpack.c.b16 %v518, %v517
        %v530 = vpack.c.b16 %v520, %v519
        %v531 = vpack.c.b16 %v522, %v521
        %v532 = vpack.c.b16 %v524, %v523
        %v557 = vunpack.c.l.b16 %v477
        %v558 = vunpack.c.l.b16 %v478
        %v559 = vunpack.c.l.b16 %v479
        %v560 = vunpack.c.l.b16 %v480
        %v561 = vunpack.c.l.b16 %v481
        %v562 = vunpack.c.l.b16 %v482
        %v563 = vunpack.c.l.b16 %v483
        %v564 = vunpack.c.l.b16 %v484
        %v565 = vunpack.c.l.b16 %v485
        %v566 = vunpack.c.l.b16 %v486
        %v567 = vunpack.c.l.b16 %v487
        %v568 = vunpack.c.l.b16 %v488
        %v569 = vunpack.c.l.b16 %v489
        %v570 = vunpack.c.l.b16 %v490
        %v571 = vunpack.c.l.b16 %v491
        %v572 = vunpack.c.l.b16 %v492
        %v573 = vpack.c.b16 %v558, %v557
        %v574 = vpack.c.b16 %v560, %v559
        %v575 = vpack.c.b16 %v562, %v561
        %v576 = vpack.c.b16 %v564, %v563
        %v577 = vpack.c.b16 %v566, %v565
        %v578 = vpack.c.b16 %v568, %v567
        %v579 = vpack.c.b16 %v570, %v569
        %v580 = vpack.c.b16 %v572, %v571
        %589 = vmatprep.subr.bf16.mxu0 0
        %590 = vmatpush1.bf16.msra.mxu0 %v573
        %591 = vmatprep.subr.bf16.mxu0 0
        %592 = vmatpush1.bf16.msra.mxu0 %v574
        %593 = vmatprep.subr.bf16.mxu0 0
        %594 = vmatpush1.bf16.msra.mxu0 %v575
        %595 = vmatprep.subr.bf16.mxu0 0
        %596 = vmatpush1.bf16.msra.mxu0 %v576
        %597 = vmatprep.subr.bf16.mxu0 0
        %598 = vmatpush1.bf16.msra.mxu0 %v577
        %599 = vmatprep.subr.bf16.mxu0 0
        %600 = vmatpush1.bf16.msra.mxu0 %v578
        %601 = vmatprep.subr.bf16.mxu0 0
        %602 = vmatpush1.bf16.msra.mxu0 %v579
        %603 = vmatprep.subr.bf16.mxu0 0
        %604 = vmatpush1.bf16.msra.mxu0 %v580
        %605 = vmatprep.subr.bf16.mxu0 0
        %606 = vmatpush1.bf16.msra.mxu0 0
        %607 = vmatprep.subr.bf16.mxu0 0
        %608 = vmatpush1.bf16.msra.mxu0 0
        %609 = vmatprep.subr.bf16.mxu0 0
        %610 = vmatpush1.bf16.msra.mxu0 0
        %611 = vmatprep.subr.bf16.mxu0 0
        %612 = vmatpush1.bf16.msra.mxu0 0
        %613 = vmatprep.subr.bf16.mxu0 0
        %614 = vmatpush1.bf16.msra.mxu0 0
        %615 = vmatprep.subr.bf16.mxu0 0
        %616 = vmatpush1.bf16.msra.mxu0 0
        %617 = vmatprep.subr.bf16.mxu0 0
        %618 = vmatpush1.bf16.msra.mxu0 0
        %619 = vmatprep.subr.bf16.mxu0 0
        %620 = vmatpush1.bf16.msra.mxu0 0
        %621 = vmatprep.mubr.bf16.mxu0 0
        %622 = vmatmul.mubr.bf16.gmra.mrb[0].mxu0 %v525
        %v623 = vpop.f32.mrb[0].mxu0
        %v624 = vadd.f32 0.0, %v623
        %v625 = vpop.f32.mrb[0].mxu0
        %v626 = vpop.f32.mrb[0].mxu0
        %v627 = vadd.f32 0.0, %v626
        %v628 = vpop.f32.mrb[0].mxu0
        %629 = vmatprep.mubr.bf16.mxu0 0
        %630 = vmatmul.mubr.bf16.gmra.mrb[0].mxu0 %v526
        %v631 = vpop.f32.mrb[0].mxu0
        %v632 = vadd.f32 0.0, %v631
        %v633 = vpop.f32.mrb[0].mxu0
        %v634 = vpop.f32.mrb[0].mxu0
        %v635 = vadd.f32 0.0, %v634
        %v636 = vpop.f32.mrb[0].mxu0
        %637 = vmatprep.mubr.bf16.mxu0 0
        %638 = vmatmul.mubr.bf16.gmra.mrb[0].mxu0 %v527
        %v639 = vpop.f32.mrb[0].mxu0
        %v640 = vadd.f32 0.0, %v639
        %v641 = vpop.f32.mrb[0].mxu0
        %v642 = vpop.f32.mrb[0].mxu0
        %v643 = vadd.f32 0.0, %v642
        %v644 = vpop.f32.mrb[0].mxu0
        %645 = vmatprep.mubr.bf16.mxu0 0
        %646 = vmatmul.mubr.bf16.gmra.mrb[0].mxu0 %v528
        %v647 = vpop.f32.mrb[0].mxu0
        %v648 = vadd.f32 0.0, %v647
        %v649 = vpop.f32.mrb[0].mxu0
        %v650 = vpop.f32.mrb[0].mxu0
        %v651 = vadd.f32 0.0, %v650
        %v652 = vpop.f32.mrb[0].mxu0
        %653 = vmatprep.mubr.bf16.mxu0 0
        %654 = vmatmul.mubr.bf16.gmra.mrb[0].mxu0 %v529
        %v655 = vpop.f32.mrb[0].mxu0
        %v656 = vadd.f32 0.0, %v655
        %v657 = vpop.f32.mrb[0].mxu0
        %v658 = vpop.f32.mrb[0].mxu0
        %v659 = vadd.f32 0.0, %v658
        %v660 = vpop.f32.mrb[0].mxu0
        %661 = vmatprep.mubr.bf16.mxu0 0
        %662 = vmatmul.mubr.bf16.gmra.mrb[0].mxu0 %v530
        %v663 = vpop.f32.mrb[0].mxu0
        %v664 = vadd.f32 0.0, %v663
        %v665 = vpop.f32.mrb[0].mxu0
        %v666 = vpop.f32.mrb[0].mxu0
        %v667 = vadd.f32 0.0, %v666
        %v668 = vpop.f32.mrb[0].mxu0
        %669 = vmatprep.mubr.bf16.mxu0 0
        %670 = vmatmul.mubr.bf16.gmra.mrb[0].mxu0 %v531
        %v671 = vpop.f32.mrb[0].mxu0
        %v672 = vadd.f32 0.0, %v671
        %v673 = vpop.f32.mrb[0].mxu0
        %v674 = vpop.f32.mrb[0].mxu0
        %v675 = vadd.f32 0.0, %v674
        %v676 = vpop.f32.mrb[0].mxu0
        %677 = vmatprep.mubr.bf16.mxu0 0
        %678 = vmatmul.mubr.bf16.gmra.mrb[0].mxu0 %v532
        %v679 = vpop.f32.mrb[0].mxu0
        %v680 = vadd.f32 0.0, %v679
        %v681 = vpop.f32.mrb[0].mxu0
        %v682 = vpop.f32.mrb[0].mxu0
        %v683 = vadd.f32 0.0, %v682
        %v684 = vpop.f32.mrb[0].mxu0
        %685 = vdwg.mxu0
        %v686 = vadd.f32 %v445, %v624
        %v687 = vadd.f32 %v446, %v627
        %v688 = vadd.f32 %v447, %v632
        %v689 = vadd.f32 %v448, %v635
        %v690 = vadd.f32 %v449, %v640
        %v691 = vadd.f32 %v450, %v643
        %v692 = vadd.f32 %v451, %v648
        %v693 = vadd.f32 %v452, %v651
        %v694 = vadd.f32 %v453, %v656
        %v695 = vadd.f32 %v454, %v659
        %v696 = vadd.f32 %v455, %v664
        %v697 = vadd.f32 %v456, %v667
        %v698 = vadd.f32 %v457, %v672
        %v699 = vadd.f32 %v458, %v675
        %v700 = vadd.f32 %v459, %v680
        %v701 = vadd.f32 %v460, %v683
        %702 = vst [vmem:[#allocation2] sm:$0xff] %v686
        %703 = vst [vmem:[#allocation2 + $0x8] sm:$0xff] %v687
        %704 = vst [vmem:[#allocation2 + $0x10] sm:$0xff] %v688
        %705 = vst [vmem:[#allocation2 + $0x18] sm:$0xff] %v689
        %706 = vst [vmem:[#allocation2 + $0x20] sm:$0xff] %v690
        %707 = vst [vmem:[#allocation2 + $0x28] sm:$0xff] %v691
        %708 = vst [vmem:[#allocation2 + $0x30] sm:$0xff] %v692
        %709 = vst [vmem:[#allocation2 + $0x38] sm:$0xff] %v693
        %710 = vst [vmem:[#allocation2 + $0x40] sm:$0xff] %v694
        %711 = vst [vmem:[#allocation2 + $0x48] sm:$0xff] %v695
        %712 = vst [vmem:[#allocation2 + $0x50] sm:$0xff] %v696
        %713 = vst [vmem:[#allocation2 + $0x58] sm:$0xff] %v697
        %714 = vst [vmem:[#allocation2 + $0x60] sm:$0xff] %v698
        %715 = vst [vmem:[#allocation2 + $0x68] sm:$0xff] %v699
        %716 = vst [vmem:[#allocation2 + $0x70] sm:$0xff] %v700
        %717 = vst [vmem:[#allocation2 + $0x78] sm:$0xff] %v701
        %p718 = scmp.eq.s32.totalorder %s38, 1
        // Predicated region
        $region69: #{tpu_custom_call.1} parent=47 // pred_check
          %p719 = pneg %p718
        $region70: #{tpu_custom_call.1} parent=47 // pred_check_branch
          %721 = sbr.rel (%p719) target = $region72
        $region71: #{tpu_custom_call.1} parent=47 // pred_region
          %v722 = vld [vmem:[#allocation2] sm:$0xff]
          %v723 = vld [vmem:[#allocation2 + $0x8] sm:$0xff]
          %v724 = vld [vmem:[#allocation2 + $0x10] sm:$0xff]
          %v725 = vld [vmem:[#allocation2 + $0x18] sm:$0xff]
          %v726 = vld [vmem:[#allocation2 + $0x20] sm:$0xff]
          %v727 = vld [vmem:[#allocation2 + $0x28] sm:$0xff]
          %v728 = vld [vmem:[#allocation2 + $0x30] sm:$0xff]
          %v729 = vld [vmem:[#allocation2 + $0x38] sm:$0xff]
          %v730 = vld [vmem:[#allocation2 + $0x40] sm:$0xff]
          %v731 = vld [vmem:[#allocation2 + $0x48] sm:$0xff]
          %v732 = vld [vmem:[#allocation2 + $0x50] sm:$0xff]
          %v733 = vld [vmem:[#allocation2 + $0x58] sm:$0xff]
          %v734 = vld [vmem:[#allocation2 + $0x60] sm:$0xff]
          %v735 = vld [vmem:[#allocation2 + $0x68] sm:$0xff]
          %v736 = vld [vmem:[#allocation2 + $0x70] sm:$0xff]
          %v737 = vld [vmem:[#allocation2 + $0x78] sm:$0xff]
          %v738 = vld [vmem:[#allocation8] sm:$0xff]
          %v739 = vld [vmem:[#allocation8 + $0x8] sm:$0xff]
          %v740 = vld [vmem:[#allocation8 + $0x10] sm:$0xff]
          %v741 = vld [vmem:[#allocation8 + $0x18] sm:$0xff]
          %v742 = vld [vmem:[#allocation8 + $0x20] sm:$0xff]
          %v743 = vld [vmem:[#allocation8 + $0x28] sm:$0xff]
          %v744 = vld [vmem:[#allocation8 + $0x30] sm:$0xff]
          %v745 = vld [vmem:[#allocation8 + $0x38] sm:$0xff]
          %v746 = vld [vmem:[#allocation8 + $0x40] sm:$0xff]
          %v747 = vld [vmem:[#allocation8 + $0x48] sm:$0xff]
          %v748 = vld [vmem:[#allocation8 + $0x50] sm:$0xff]
          %v749 = vld [vmem:[#allocation8 + $0x58] sm:$0xff]
          %v750 = vld [vmem:[#allocation8 + $0x60] sm:$0xff]
          %v751 = vld [vmem:[#allocation8 + $0x68] sm:$0xff]
          %v752 = vld [vmem:[#allocation8 + $0x70] sm:$0xff]
          %v753 = vld [vmem:[#allocation8 + $0x78] sm:$0xff]
          %v754 = vld [vmem:[%s3] sm:$0x1]
          %v756 = vlaneseq
          %v757 = vshrl.u32 %v756, 7
          %v758 = vsub.s32 0, %v757
          %v759 = vrot.slane %v754, %v758
          %761 = vmatprep.subr.mxu0 0.0
          %762 = vmatpush1.msra.mxu0 %v738
          %763 = vmatprep.subr.mxu0 0.0
          %764 = vmatpush1.msra.mxu0 %v739
          %765 = vmatprep.subr.mxu0 0.0
          %766 = vmatpush1.msra.mxu0 %v740
          %767 = vmatprep.subr.mxu0 0.0
          %768 = vmatpush1.msra.mxu0 %v741
          %769 = vmatprep.subr.mxu0 0.0
          %770 = vmatpush1.msra.mxu0 %v742
          %771 = vmatprep.subr.mxu0 0.0
          %772 = vmatpush1.msra.mxu0 %v743
          %773 = vmatprep.subr.mxu0 0.0
          %774 = vmatpush1.msra.mxu0 %v744
          %775 = vmatprep.subr.mxu0 0.0
          %776 = vmatpush1.msra.mxu0 %v745
          %777 = vmatprep.subr.mxu0 0.0
          %778 = vmatpush1.msra.mxu0 %v746
          %779 = vmatprep.subr.mxu0 0.0
          %780 = vmatpush1.msra.mxu0 %v747
          %781 = vmatprep.subr.mxu0 0.0
          %782 = vmatpush1.msra.mxu0 %v748
          %783 = vmatprep.subr.mxu0 0.0
          %784 = vmatpush1.msra.mxu0 %v749
          %785 = vmatprep.subr.mxu0 0.0
          %786 = vmatpush1.msra.mxu0 %v750
          %787 = vmatprep.subr.mxu0 0.0
          %788 = vmatpush1.msra.mxu0 %v751
          %789 = vmatprep.subr.mxu0 0.0
          %790 = vmatpush1.msra.mxu0 %v752
          %791 = vmatprep.subr.mxu0 0.0
          %792 = vmatpush1.msra.mxu0 %v753
          %793 = vmatprep.subr.mxu0 0.0
          %794 = vmatpush1.msra.mxu0 0.0
          %795 = vmatprep.subr.mxu0 0.0
          %796 = vmatpush1.msra.mxu0 0.0
          %797 = vmatprep.subr.mxu0 0.0
          %798 = vmatpush1.msra.mxu0 0.0
          %799 = vmatprep.subr.mxu0 0.0
          %800 = vmatpush1.msra.mxu0 0.0
          %801 = vmatprep.subr.mxu0 0.0
          %802 = vmatpush1.msra.mxu0 0.0
          %803 = vmatprep.subr.mxu0 0.0
          %804 = vmatpush1.msra.mxu0 0.0
          %805 = vmatprep.subr.mxu0 0.0
          %806 = vmatpush1.msra.mxu0 0.0
          %807 = vmatprep.subr.mxu0 0.0
          %808 = vmatpush1.msra.mxu0 0.0
          %809 = vmatprep.subr.mxu0 0.0
          %810 = vmatpush1.msra.mxu0 0.0
          %811 = vmatprep.subr.mxu0 0.0
          %812 = vmatpush1.msra.mxu0 0.0
          %813 = vmatprep.subr.mxu0 0.0
          %814 = vmatpush1.msra.mxu0 0.0
          %815 = vmatprep.subr.mxu0 0.0
          %816 = vmatpush1.msra.mxu0 0.0
          %817 = vmatprep.subr.mxu0 0.0
          %818 = vmatpush1.msra.mxu0 0.0
          %819 = vmatprep.subr.mxu0 0.0
          %820 = vmatpush1.msra.mxu0 0.0
          %821 = vmatprep.subr.mxu0 0.0
          %822 = vmatpush1.msra.mxu0 0.0
          %823 = vmatprep.subr.mxu0 0.0
          %824 = vmatpush1.msra.mxu0 0.0
          %825 = vmatprep.mubr.f32.mxu0 0.0
          %826 = vmatmul.mubr.f32.gmra.mrb[0].mxu0 %v722
          %v827 = vpop.f32.mrb[0].mxu0
          %v828 = vadd.f32 %v759, %v827
          %v829 = vpop.f32.mrb[0].mxu0
          %830 = vmatprep.mubr.f32.mxu0 0.0
          %831 = vmatmul.mubr.f32.gmra.mrb[0].mxu0 %v723
          %v832 = vpop.f32.mrb[0].mxu0
          %v833 = vadd.f32 %v759, %v832
          %v834 = vpop.f32.mrb[0].mxu0
          %835 = vmatprep.mubr.f32.mxu0 0.0
          %836 = vmatmul.mubr.f32.gmra.mrb[0].mxu0 %v724
          %v837 = vpop.f32.mrb[0].mxu0
          %v838 = vadd.f32 %v759, %v837
          %v839 = vpop.f32.mrb[0].mxu0
          %840 = vmatprep.mubr.f32.mxu0 0.0
          %841 = vmatmul.mubr.f32.gmra.mrb[0].mxu0 %v725
          %v842 = vpop.f32.mrb[0].mxu0
          %v843 = vadd.f32 %v759, %v842
          %v844 = vpop.f32.mrb[0].mxu0
          %845 = vmatprep.mubr.f32.mxu0 0.0
          %846 = vmatmul.mubr.f32.gmra.mrb[0].mxu0 %v726
          %v847 = vpop.f32.mrb[0].mxu0
          %v848 = vadd.f32 %v759, %v847
          %v849 = vpop.f32.mrb[0].mxu0
          %850 = vmatprep.mubr.f32.mxu0 0.0
          %851 = vmatmul.mubr.f32.gmra.mrb[0].mxu0 %v727
          %v852 = vpop.f32.mrb[0].mxu0
          %v853 = vadd.f32 %v759, %v852
          %v854 = vpop.f32.mrb[0].mxu0
          %855 = vmatprep.mubr.f32.mxu0 0.0
          %856 = vmatmul.mubr.f32.gmra.mrb[0].mxu0 %v728
          %v857 = vpop.f32.mrb[0].mxu0
          %v858 = vadd.f32 %v759, %v857
          %v859 = vpop.f32.mrb[0].mxu0
          %860 = vmatprep.mubr.f32.mxu0 0.0
          %861 = vmatmul.mubr.f32.gmra.mrb[0].mxu0 %v729
          %v862 = vpop.f32.mrb[0].mxu0
          %v863 = vadd.f32 %v759, %v862
          %v864 = vpop.f32.mrb[0].mxu0
          %865 = vmatprep.mubr.f32.mxu0 0.0
          %866 = vmatmul.mubr.f32.gmra.mrb[0].mxu0 %v730
          %v867 = vpop.f32.mrb[0].mxu0
          %v868 = vadd.f32 %v759, %v867
          %v869 = vpop.f32.mrb[0].mxu0
          %870 = vmatprep.mubr.f32.mxu0 0.0
          %871 = vmatmul.mubr.f32.gmra.mrb[0].mxu0 %v731
          %v872 = vpop.f32.mrb[0].mxu0
          %v873 = vadd.f32 %v759, %v872
          %v874 = vpop.f32.mrb[0].mxu0
          %875 = vmatprep.mubr.f32.mxu0 0.0
          %876 = vmatmul.mubr.f32.gmra.mrb[0].mxu0 %v732
          %v877 = vpop.f32.mrb[0].mxu0
          %v878 = vadd.f32 %v759, %v877
          %v879 = vpop.f32.mrb[0].mxu0
          %880 = vmatprep.mubr.f32.mxu0 0.0
          %881 = vmatmul.mubr.f32.gmra.mrb[0].mxu0 %v733
          %v882 = vpop.f32.mrb[0].mxu0
          %v883 = vadd.f32 %v759, %v882
          %v884 = vpop.f32.mrb[0].mxu0
          %885 = vmatprep.mubr.f32.mxu0 0.0
          %886 = vmatmul.mubr.f32.gmra.mrb[0].mxu0 %v734
          %v887 = vpop.f32.mrb[0].mxu0
          %v888 = vadd.f32 %v759, %v887
          %v889 = vpop.f32.mrb[0].mxu0
          %890 = vmatprep.mubr.f32.mxu0 0.0
          %891 = vmatmul.mubr.f32.gmra.mrb[0].mxu0 %v735
          %v892 = vpop.f32.mrb[0].mxu0
          %v893 = vadd.f32 %v759, %v892
          %v894 = vpop.f32.mrb[0].mxu0
          %895 = vmatprep.mubr.f32.mxu0 0.0
          %896 = vmatmul.mubr.f32.gmra.mrb[0].mxu0 %v736
          %v897 = vpop.f32.mrb[0].mxu0
          %v898 = vadd.f32 %v759, %v897
          %v899 = vpop.f32.mrb[0].mxu0
          %900 = vmatprep.mubr.f32.mxu0 0.0
          %901 = vmatmul.mubr.f32.gmra.mrb[0].mxu0 %v737
          %v902 = vpop.f32.mrb[0].mxu0
          %v903 = vadd.f32 %v759, %v902
          %v904 = vpop.f32.mrb[0].mxu0
          %905 = vdwg.mxu0
          %906 = vst [vmem:[%s412] sm:$0xff] %v828
          %907 = vst [vmem:[%s412 + $0x8] sm:$0xff] %v833
          %908 = vst [vmem:[%s412 + $0x10] sm:$0xff] %v838
          %909 = vst [vmem:[%s412 + $0x18] sm:$0xff] %v843
          %910 = vst [vmem:[%s412 + $0x20] sm:$0xff] %v848
          %911 = vst [vmem:[%s412 + $0x28] sm:$0xff] %v853
          %912 = vst [vmem:[%s412 + $0x30] sm:$0xff] %v858
          %913 = vst [vmem:[%s412 + $0x38] sm:$0xff] %v863
          %914 = vst [vmem:[%s412 + $0x40] sm:$0xff] %v868
          %915 = vst [vmem:[%s412 + $0x48] sm:$0xff] %v873
          %916 = vst [vmem:[%s412 + $0x50] sm:$0xff] %v878
          %917 = vst [vmem:[%s412 + $0x58] sm:$0xff] %v883
          %918 = vst [vmem:[%s412 + $0x60] sm:$0xff] %v888
          %919 = vst [vmem:[%s412 + $0x68] sm:$0xff] %v893
          %920 = vst [vmem:[%s412 + $0x70] sm:$0xff] %v898
          %921 = vst [vmem:[%s412 + $0x78] sm:$0xff] %v903
          %v922 = vld [vmem:[%s4] sm:$0x1]
          %v924 = vlaneseq
          %v925 = vshrl.u32 %v924, 7
          %v926 = vsub.s32 0, %v925
          %v927 = vrot.slane %v922, %v926
          %v929 = vmul.f32 %v828, %v927
          %v930 = vmul.f32 %v833, %v927
          %v931 = vmul.f32 %v838, %v927
          %v932 = vmul.f32 %v843, %v927
          %v933 = vmul.f32 %v848, %v927
          %v934 = vmul.f32 %v853, %v927
          %v935 = vmul.f32 %v858, %v927
          %v936 = vmul.f32 %v863, %v927
          %v937 = vmul.f32 %v868, %v927
          %v938 = vmul.f32 %v873, %v927
          %v939 = vmul.f32 %v878, %v927
          %v940 = vmul.f32 %v883, %v927
          %v941 = vmul.f32 %v888, %v927
          %v942 = vmul.f32 %v893, %v927
          %v943 = vmul.f32 %v898, %v927
          %v944 = vmul.f32 %v903, %v927
          %v945 = vld [vmem:[%s5] sm:$0x1]
          %v947 = vlaneseq
          %v948 = vshrl.u32 %v947, 7
          %v949 = vsub.s32 0, %v948
          %v950 = vrot.slane %v945, %v949
          %v952 = vadd.f32 %v929, %v950
          %v953 = vadd.f32 %v930, %v950
          %v954 = vadd.f32 %v931, %v950
          %v955 = vadd.f32 %v932, %v950
          %v956 = vadd.f32 %v933, %v950
          %v957 = vadd.f32 %v934, %v950
          %v958 = vadd.f32 %v935, %v950
          %v959 = vadd.f32 %v936, %v950
          %v960 = vadd.f32 %v937, %v950
          %v961 = vadd.f32 %v938, %v950
          %v962 = vadd.f32 %v939, %v950
          %v963 = vadd.f32 %v940, %v950
          %v964 = vadd.f32 %v941, %v950
          %v965 = vadd.f32 %v942, %v950
          %v966 = vadd.f32 %v943, %v950
          %v967 = vadd.f32 %v944, %v950
          %v968 = vmax.f32 %v952, 0.0
          %v969 = vmax.f32 %v953, 0.0
          %v970 = vmax.f32 %v954, 0.0
          %v971 = vmax.f32 %v955, 0.0
          %v972 = vmax.f32 %v956, 0.0
          %v973 = vmax.f32 %v957, 0.0
          %v974 = vmax.f32 %v958, 0.0
          %v975 = vmax.f32 %v959, 0.0
          %v976 = vmax.f32 %v960, 0.0
          %v977 = vmax.f32 %v961, 0.0
          %v978 = vmax.f32 %v962, 0.0
          %v979 = vmax.f32 %v963, 0.0
          %v980 = vmax.f32 %v964, 0.0
          %v981 = vmax.f32 %v965, 0.0
          %v982 = vmax.f32 %v966, 0.0
          %v983 = vmax.f32 %v967, 0.0
          %v984 = vld [vmem:[#allocation9] sm:$0xff]
          %v985 = vld [vmem:[#allocation9 + $0x8] sm:$0xff]
          %v986 = vld [vmem:[#allocation9 + $0x10] sm:$0xff]
          %v987 = vld [vmem:[#allocation9 + $0x18] sm:$0xff]
          %v988 = vld [vmem:[#allocation9 + $0x20] sm:$0xff]
          %v989 = vld [vmem:[#allocation9 + $0x28] sm:$0xff]
          %v990 = vld [vmem:[#allocation9 + $0x30] sm:$0xff]
          %v991 = vld [vmem:[#allocation9 + $0x38] sm:$0xff]
          %v992 = vld [vmem:[#allocation9 + $0x40] sm:$0xff]
          %v993 = vld [vmem:[#allocation9 + $0x48] sm:$0xff]
          %v994 = vld [vmem:[#allocation9 + $0x50] sm:$0xff]
          %v995 = vld [vmem:[#allocation9 + $0x58] sm:$0xff]
          %v996 = vld [vmem:[#allocation9 + $0x60] sm:$0xff]
          %v997 = vld [vmem:[#allocation9 + $0x68] sm:$0xff]
          %v998 = vld [vmem:[#allocation9 + $0x70] sm:$0xff]
          %v999 = vld [vmem:[#allocation9 + $0x78] sm:$0xff]
          %1000 = vmatprep.subr.mxu0 0.0
          %1001 = vmatpush1.msra.mxu0 %v984
          %1002 = vmatprep.subr.mxu0 0.0
          %1003 = vmatpush1.msra.mxu0 %v985
          %1004 = vmatprep.subr.mxu0 0.0
          %1005 = vmatpush1.msra.mxu0 %v986
          %1006 = vmatprep.subr.mxu0 0.0
          %1007 = vmatpush1.msra.mxu0 %v987
          %1008 = vmatprep.subr.mxu0 0.0
          %1009 = vmatpush1.msra.mxu0 %v988
          %1010 = vmatprep.subr.mxu0 0.0
          %1011 = vmatpush1.msra.mxu0 %v989
          %1012 = vmatprep.subr.mxu0 0.0
          %1013 = vmatpush1.msra.mxu0 %v990
          %1014 = vmatprep.subr.mxu0 0.0
          %1015 = vmatpush1.msra.mxu0 %v991
          %1016 = vmatprep.subr.mxu0 0.0
          %1017 = vmatpush1.msra.mxu0 %v992
          %1018 = vmatprep.subr.mxu0 0.0
          %1019 = vmatpush1.msra.mxu0 %v993
          %1020 = vmatprep.subr.mxu0 0.0
          %1021 = vmatpush1.msra.mxu0 %v994
          %1022 = vmatprep.subr.mxu0 0.0
          %1023 = vmatpush1.msra.mxu0 %v995
          %1024 = vmatprep.subr.mxu0 0.0
          %1025 = vmatpush1.msra.mxu0 %v996
          %1026 = vmatprep.subr.mxu0 0.0
          %1027 = vmatpush1.msra.mxu0 %v997
          %1028 = vmatprep.subr.mxu0 0.0
          %1029 = vmatpush1.msra.mxu0 %v998
          %1030 = vmatprep.subr.mxu0 0.0
          %1031 = vmatpush1.msra.mxu0 %v999
          %1032 = vmatprep.subr.mxu0 0.0
          %1033 = vmatpush1.msra.mxu0 0.0
          %1034 = vmatprep.subr.mxu0 0.0
          %1035 = vmatpush1.msra.mxu0 0.0
          %1036 = vmatprep.subr.mxu0 0.0
          %1037 = vmatpush1.msra.mxu0 0.0
          %1038 = vmatprep.subr.mxu0 0.0
          %1039 = vmatpush1.msra.mxu0 0.0
          %1040 = vmatprep.subr.mxu0 0.0
          %1041 = vmatpush1.msra.mxu0 0.0
          %1042 = vmatprep.subr.mxu0 0.0
          %1043 = vmatpush1.msra.mxu0 0.0
          %1044 = vmatprep.subr.mxu0 0.0
          %1045 = vmatpush1.msra.mxu0 0.0
          %1046 = vmatprep.subr.mxu0 0.0
          %1047 = vmatpush1.msra.mxu0 0.0
          %1048 = vmatprep.subr.mxu0 0.0
          %1049 = vmatpush1.msra.mxu0 0.0
          %1050 = vmatprep.subr.mxu0 0.0
          %1051 = vmatpush1.msra.mxu0 0.0
          %1052 = vmatprep.subr.mxu0 0.0
          %1053 = vmatpush1.msra.mxu0 0.0
          %1054 = vmatprep.subr.mxu0 0.0
          %1055 = vmatpush1.msra.mxu0 0.0
          %1056 = vmatprep.subr.mxu0 0.0
          %1057 = vmatpush1.msra.mxu0 0.0
          %1058 = vmatprep.subr.mxu0 0.0
          %1059 = vmatpush1.msra.mxu0 0.0
          %1060 = vmatprep.subr.mxu0 0.0
          %1061 = vmatpush1.msra.mxu0 0.0
          %1062 = vmatprep.subr.mxu0 0.0
          %1063 = vmatpush1.msra.mxu0 0.0
          %1064 = vmatprep.mubr.f32.mxu0 0.0
          %1065 = vmatmul.mubr.f32.gmra.mrb[0].mxu0 %v968
          %v1066 = vpop.f32.mrb[0].mxu0
          %v1067 = vadd.f32 0.0, %v1066
          %v1068 = vpop.f32.mrb[0].mxu0
          %1069 = vmatprep.mubr.f32.mxu0 0.0
          %1070 = vmatmul.mubr.f32.gmra.mrb[0].mxu0 %v969
          %v1071 = vpop.f32.mrb[0].mxu0
          %v1072 = vadd.f32 0.0, %v1071
          %v1073 = vpop.f32.mrb[0].mxu0
          %1074 = vmatprep.mubr.f32.mxu0 0.0
          %1075 = vmatmul.mubr.f32.gmra.mrb[0].mxu0 %v970
          %v1076 = vpop.f32.mrb[0].mxu0
          %v1077 = vadd.f32 0.0, %v1076
          %v1078 = vpop.f32.mrb[0].mxu0
          %1079 = vmatprep.mubr.f32.mxu0 0.0
          %1080 = vmatmul.mubr.f32.gmra.mrb[0].mxu0 %v971
          %v1081 = vpop.f32.mrb[0].mxu0
          %v1082 = vadd.f32 0.0, %v1081
          %v1083 = vpop.f32.mrb[0].mxu0
          %1084 = vmatprep.mubr.f32.mxu0 0.0
          %1085 = vmatmul.mubr.f32.gmra.mrb[0].mxu0 %v972
          %v1086 = vpop.f32.mrb[0].mxu0
          %v1087 = vadd.f32 0.0, %v1086
          %v1088 = vpop.f32.mrb[0].mxu0
          %1089 = vmatprep.mubr.f32.mxu0 0.0
          %1090 = vmatmul.mubr.f32.gmra.mrb[0].mxu0 %v973
          %v1091 = vpop.f32.mrb[0].mxu0
          %v1092 = vadd.f32 0.0, %v1091
          %v1093 = vpop.f32.mrb[0].mxu0
          %1094 = vmatprep.mubr.f32.mxu0 0.0
          %1095 = vmatmul.mubr.f32.gmra.mrb[0].mxu0 %v974
          %v1096 = vpop.f32.mrb[0].mxu0
          %v1097 = vadd.f32 0.0, %v1096
          %v1098 = vpop.f32.mrb[0].mxu0
          %1099 = vmatprep.mubr.f32.mxu0 0.0
          %1100 = vmatmul.mubr.f32.gmra.mrb[0].mxu0 %v975
          %v1101 = vpop.f32.mrb[0].mxu0
          %v1102 = vadd.f32 0.0, %v1101
          %v1103 = vpop.f32.mrb[0].mxu0
          %1104 = vmatprep.mubr.f32.mxu0 0.0
          %1105 = vmatmul.mubr.f32.gmra.mrb[0].mxu0 %v976
          %v1106 = vpop.f32.mrb[0].mxu0
          %v1107 = vadd.f32 0.0, %v1106
          %v1108 = vpop.f32.mrb[0].mxu0
          %1109 = vmatprep.mubr.f32.mxu0 0.0
          %1110 = vmatmul.mubr.f32.gmra.mrb[0].mxu0 %v977
          %v1111 = vpop.f32.mrb[0].mxu0
          %v1112 = vadd.f32 0.0, %v1111
          %v1113 = vpop.f32.mrb[0].mxu0
          %1114 = vmatprep.mubr.f32.mxu0 0.0
          %1115 = vmatmul.mubr.f32.gmra.mrb[0].mxu0 %v978
          %v1116 = vpop.f32.mrb[0].mxu0
          %v1117 = vadd.f32 0.0, %v1116
          %v1118 = vpop.f32.mrb[0].mxu0
          %1119 = vmatprep.mubr.f32.mxu0 0.0
          %1120 = vmatmul.mubr.f32.gmra.mrb[0].mxu0 %v979
          %v1121 = vpop.f32.mrb[0].mxu0
          %v1122 = vadd.f32 0.0, %v1121
          %v1123 = vpop.f32.mrb[0].mxu0
          %1124 = vmatprep.mubr.f32.mxu0 0.0
          %1125 = vmatmul.mubr.f32.gmra.mrb[0].mxu0 %v980
          %v1126 = vpop.f32.mrb[0].mxu0
          %v1127 = vadd.f32 0.0, %v1126
          %v1128 = vpop.f32.mrb[0].mxu0
          %1129 = vmatprep.mubr.f32.mxu0 0.0
          %1130 = vmatmul.mubr.f32.gmra.mrb[0].mxu0 %v981
          %v1131 = vpop.f32.mrb[0].mxu0
          %v1132 = vadd.f32 0.0, %v1131
          %v1133 = vpop.f32.mrb[0].mxu0
          %1134 = vmatprep.mubr.f32.mxu0 0.0
          %1135 = vmatmul.mubr.f32.gmra.mrb[0].mxu0 %v982
          %v1136 = vpop.f32.mrb[0].mxu0
          %v1137 = vadd.f32 0.0, %v1136
          %v1138 = vpop.f32.mrb[0].mxu0
          %1139 = vmatprep.mubr.f32.mxu0 0.0
          %1140 = vmatmul.mubr.f32.gmra.mrb[0].mxu0 %v983
          %v1141 = vpop.f32.mrb[0].mxu0
          %v1142 = vadd.f32 0.0, %v1141
          %v1143 = vpop.f32.mrb[0].mxu0
          %1144 = vdwg.mxu0
          %v1145 = vpack.c.bf16 %v1072, %v1067
          %v1146 = vpack.c.bf16 %v1082, %v1077
          %v1147 = vpack.c.bf16 %v1092, %v1087
          %v1148 = vpack.c.bf16 %v1102, %v1097
          %v1149 = vpack.c.bf16 %v1112, %v1107
          %v1150 = vpack.c.bf16 %v1122, %v1117
          %v1151 = vpack.c.bf16 %v1132, %v1127
          %v1152 = vpack.c.bf16 %v1142, %v1137
          %v1161 = vunpack.c.l.b16 %v1145
          %v1162 = vunpack.c.h.b16 %v1145
          %v1163 = vunpack.c.l.b16 %v1146
          %v1164 = vunpack.c.h.b16 %v1146
          %v1165 = vunpack.c.l.b16 %v1147
          %v1166 = vunpack.c.h.b16 %v1147
          %v1167 = vunpack.c.l.b16 %v1148
          %v1168 = vunpack.c.h.b16 %v1148
          %v1169 = vunpack.c.l.b16 %v1149
          %v1170 = vunpack.c.h.b16 %v1149
          %v1171 = vunpack.c.l.b16 %v1150
          %v1172 = vunpack.c.h.b16 %v1150
          %v1173 = vunpack.c.l.b16 %v1151
          %v1174 = vunpack.c.h.b16 %v1151
          %v1175 = vunpack.c.l.b16 %v1152
          %v1176 = vunpack.c.h.b16 %v1152
          %v1177 = vpack.c.b16 %v1161, %v1161
          %v1178 = vpack.c.b16 %v1162, %v1162
          %v1179 = vpack.c.b16 %v1163, %v1163
          %v1180 = vpack.c.b16 %v1164, %v1164
          %v1181 = vpack.c.b16 %v1165, %v1165
          %v1182 = vpack.c.b16 %v1166, %v1166
          %v1183 = vpack.c.b16 %v1167, %v1167
          %v1184 = vpack.c.b16 %v1168, %v1168
          %v1185 = vpack.c.b16 %v1169, %v1169
          %v1186 = vpack.c.b16 %v1170, %v1170
          %v1187 = vpack.c.b16 %v1171, %v1171
          %v1188 = vpack.c.b16 %v1172, %v1172
          %v1189 = vpack.c.b16 %v1173, %v1173
          %v1190 = vpack.c.b16 %v1174, %v1174
          %v1191 = vpack.c.b16 %v1175, %v1175
          %v1192 = vpack.c.b16 %v1176, %v1176
          %1209 = vst [vmem:[%s419] sm:$0xf] %v1177
          %1210 = vst [vmem:[%s419 + $0x4] sm:$0xf] %v1178
          %1211 = vst [vmem:[%s419 + $0x8] sm:$0xf] %v1179
          %1212 = vst [vmem:[%s419 + $0xc] sm:$0xf] %v1180
          %1213 = vst [vmem:[%s419 + $0x10] sm:$0xf] %v1181
          %1214 = vst [vmem:[%s419 + $0x14] sm:$0xf] %v1182
          %1215 = vst [vmem:[%s419 + $0x18] sm:$0xf] %v1183
          %1216 = vst [vmem:[%s419 + $0x1c] sm:$0xf] %v1184
          %1217 = vst [vmem:[%s419 + $0x20] sm:$0xf] %v1185
          %1218 = vst [vmem:[%s419 + $0x24] sm:$0xf] %v1186
          %1219 = vst [vmem:[%s419 + $0x28] sm:$0xf] %v1187
          %1220 = vst [vmem:[%s419 + $0x2c] sm:$0xf] %v1188
          %1221 = vst [vmem:[%s419 + $0x30] sm:$0xf] %v1189
          %1222 = vst [vmem:[%s419 + $0x34] sm:$0xf] %v1190
          %1223 = vst [vmem:[%s419 + $0x38] sm:$0xf] %v1191
          %1224 = vst [vmem:[%s419 + $0x3c] sm:$0xf] %v1192
        $region72: #{tpu_custom_call.1} parent=47 // pred_fallthru
          _
        %s1225 = sand.u32 %s212, 1
        %s1226 = scalar_lea.sflag [#allocation5], %s1225
        %s1227 = sand.u32 %s212, 1
        %s1228 = smul.addr %s1227, 128
        %s1229 = scalar_lea.vmem [#allocation11], %s1228
        %s1230 = sand.u32 %s238, 1
        %s1231 = scalar_lea.sflag [#allocation13], %s1230
        %s1232 = sand.u32 %s238, 1
        %s1233 = smul.addr %s1232, 64
        %s1234 = scalar_lea.vmem [#allocation12], %s1233
        // Predicated region
        $region73: #{tpu_custom_call.1} parent=47 // pred_check
          %p1235 = pneg %p222
        $region74: #{tpu_custom_call.1} parent=47 // pred_check_branch
          %1237 = sbr.rel (%p1235) target = $region76
        $region75: #{tpu_custom_call.1} parent=47 // pred_region
          %s1238 = smul.u32 16, %s37
          %s1240 = ssub.s32 2048, 2048
          %1241 = vsyncadd %s1226, %s1240
          %s1242 = smul.addr %s1238, 128
          %s1243 = scalar_lea.hbm %s7, %s1242
          %s1244 = sshll.u32 %s1229, 4
          %s1245 = int_to_ptr.vmem [resolvable:$true] %s1244
          %1250 = dma.vmem_to_hbm [thread:$0]  %s1245, 2048, %s1243, %s1226, 128, 128, 8
        $region76: #{tpu_custom_call.1} parent=47 // pred_fallthru
          _
        // Predicated region
        $region77: #{tpu_custom_call.1} parent=47 // pred_check
          %p1251 = pneg %p248
        $region78: #{tpu_custom_call.1} parent=47 // pred_check_branch
          %1253 = sbr.rel (%p1251) target = $region80
        $region79: #{tpu_custom_call.1} parent=47 // pred_region
          %s1254 = smul.u32 16, %s37
          %s1256 = ssub.s32 1024, 1024
          %1257 = vsyncadd %s1231, %s1256
          %s1258 = smul.addr %s1254, 64
          %s1259 = scalar_lea.hbm %s8, %s1258
          %s1260 = sshll.u32 %s1234, 4
          %s1261 = int_to_ptr.vmem [resolvable:$true] %s1260
          %1266 = dma.vmem_to_hbm [thread:$0]  %s1261, 1024, %s1259, %s1231, 64, 64, 4
        $region80: #{tpu_custom_call.1} parent=47 // pred_fallthru
          _
      $region48: #{tpu_custom_call.1} parent=5 // pred_fallthru
        _
      %p1267 = scmp.le.s32.totalorder 2, %s28
      // Predicated region
      $region81: #{tpu_custom_call.1} parent=5 // pred_check
        %p1268 = pneg %p1267
      $region82: #{tpu_custom_call.1} parent=5 // pred_check_branch
        %1270 = sbr.rel (%p1268) target = $region84
      $region83: #{tpu_custom_call.1} parent=5 // pred_region
        %s1271 = ssub.s32 %s28, 2
        // Predicated region
        $region85: #{tpu_custom_call.1} parent=83 // pred_check
          %p1272 = pneg %p228
        $region86: #{tpu_custom_call.1} parent=83 // pred_check_branch
          %1274 = sbr.rel (%p1272) target = $region88
        $region87: #{tpu_custom_call.1} parent=83 // pred_region
          %s1275 = sand.u32 %s213, 1
          %s1276 = scalar_lea.sflag [#allocation5], %s1275
          %s1277 = sand.u32 %s213, 1
          %s1278 = smul.addr %s1277, 128
          %s1279 = scalar_lea.vmem [#allocation11], %s1278
          %1280 = dma.done %s1276, 2048
        $region88: #{tpu_custom_call.1} parent=83 // pred_fallthru
          _
        // Predicated region
        $region89: #{tpu_custom_call.1} parent=83 // pred_check
          %p1281 = pneg %p254
        $region90: #{tpu_custom_call.1} parent=83 // pred_check_branch
          %1283 = sbr.rel (%p1281) target = $region92
        $region91: #{tpu_custom_call.1} parent=83 // pred_region
          %s1284 = sand.u32 %s239, 1
          %s1285 = scalar_lea.sflag [#allocation13], %s1284
          %s1286 = sand.u32 %s239, 1
          %s1287 = smul.addr %s1286, 64
          %s1288 = scalar_lea.vmem [#allocation12], %s1287
          %1289 = dma.done %s1285, 1024
        $region92: #{tpu_custom_call.1} parent=83 // pred_fallthru
          _
      $region84: #{tpu_custom_call.1} parent=5 // pred_fallthru
        _
    $region6: #{tpu_custom_call.1} parent=1 // loop_footer
      %s32 = sadd.s32 1, %s28
    $region7: #{tpu_custom_call.1} parent=1 // loop_footer_branch
      %27 = sbr.rel target = $region3
    $region8: #{tpu_custom_call.1} parent=1 // loop_exit
      _
    %1290 = vsyncpa [#allocation4], 1
    %s1291 = scalar_lea.sflag [#allocation4], 1
    %1292 = vsyncpa %s1291, 1
    %1293 = vsyncpa [#allocation7], 1
    %s1294 = scalar_lea.sflag [#allocation7], 1
    %1295 = vsyncpa %s1294, 1
    %1296 = vsyncpa [#allocation10], 1
    %1297 = vsyncpa [#allocation5], 1
    %s1298 = scalar_lea.sflag [#allocation5], 1
    %1299 = vsyncpa %s1298, 1
    %1300 = vsyncpa [#allocation13], 1
    %s1301 = scalar_lea.sflag [#allocation13], 1
    %1302 = vsyncpa %s1301, 1

</llo_original>
